<compile_context>
chip_gen: v7x
topology: tpu7x:2x2x1
jax: 0.10.0
libtpu: 0.0.40
codegen_flags: <defaults>
</compile_context>

<pallas_src>
import functools

import numpy as np
import jax
import jax.numpy as jnp
from jax import lax
from jax.experimental import pallas as pl
from jax.experimental.pallas import tpu as pltpu

# ---------------- config ----------------
N_VOX    = 256           # voxels
N_BATCH  = 2
K_PER_B  = 4             # synthetic "DBSCAN" fragments per batch
K        = N_BATCH * K_PER_B
HID      = 32
SEG_C    = 5             # semantic classes
GHOST_C  = 2
PPN_C    = 5             # 3 point offsets + 2 point-score logits
HEAD_C   = SEG_C + GHOST_C + PPN_C      # 12
NODE_GEO = 8
NODE_ENC = 16
PPN_FEAT = 8
NODE_DIM = NODE_ENC + PPN_FEAT          # 24 (node features fed to GNN)
EDGE_RAW = 8
MSG_DIM  = 32
VOX_ROWS = 16            # channel-major voxel output rows (>= HEAD_C+2, multiple of 8)
KE_W     = 32            # cluster/edge output width (>= 2 + NODE_DIM)


# ---------------- fused kernel: backbone + cluster features + GNN ----------------
def _fused_kernel(n_edges,
                  data_ref, member_ref, sd_ref,
                  w1_ref, b1_ref, w2_ref, b2_ref,
                  wn_ref, bn_ref,
                  wm_ref, bm_ref, we_ref, be_ref,
                  wn1_ref, bn1_ref, wn2_ref, bn2_ref,
                  vox_ref, ke_ref):
    f32, bf16 = jnp.float32, jnp.bfloat16
    data = data_ref[...]                         # (4, N) channel-major [x; y; z; energy]
    n = data.shape[1]
    coords = data[0:3, :]                        # (3, N)
    energy = data[3:4, :]                        # (1, N)

    # ---- stage 1: UResNet + PPN surrogate, channel-major W^T @ X (bf16 on MXU) ----
    # coord scale already folded into w1 by the wrapper.
    h = jnp.maximum(jnp.dot(w1_ref[...], data.astype(bf16),
                            preferred_element_type=f32) + b1_ref[...], 0.0)   # (HID, N)
    head = jnp.dot(w2_ref[...], h.astype(bf16),
                   preferred_element_type=f32) + b2_ref[...]                  # (12, N)
    seg = head[:SEG_C, :]                                                     # (5, N)
    points = head[SEG_C + GHOST_C:, :]                                        # (5, N)

    # semantic = argmax(seg) over the channel (sublane) axis, first-index tie-break
    seg_max = jnp.max(seg, axis=0, keepdims=True)
    seg_iota = lax.broadcasted_iota(jnp.int32, seg.shape, 0)
    semantic = jnp.min(jnp.where(seg >= seg_max, seg_iota, SEG_C),
                       axis=0, keepdims=True)                                 # (1, N) i32

    # deghost keep mask: argmax(ghost)==0  <=>  ghost0 >= ghost1 (already a (1, N) row)
    keep_row = (head[SEG_C:SEG_C + 1, :] >= head[SEG_C + 1:SEG_C + 2, :]).astype(f32)

    # PPN 2-class softmax: one exp + one EUP reciprocal
    z = jnp.exp(points[3:4, :] - points[4:5, :])          # exp(l0 - l1)
    soft1 = pl.reciprocal(1.0 + z, approx=True)           # p(point)     (1, N)
    soft0 = soft1 * z                                      # p(no point)  (1, N)

    # ---- stage 2: cluster (node-encoder + PPN per-cluster) features ----
    # TODO(synk): true DBSCAN clustering / dynamic deghost row slicing have no clean
    # Pallas equivalent; fixed synthetic fragments with the deghost mask folded into
    # the membership matrix are used instead.
    member = member_ref[...] * keep_row                                       # (K, N)

    # masked per-cluster argmax of the point score (f32, first-index tie-break)
    masked = jnp.where(member > 0.0, soft1, -1e30)                            # (K, N)
    rowmax = jnp.max(masked, axis=1, keepdims=True)
    midx = lax.broadcasted_iota(jnp.int32, member.shape, 1)
    cand = jnp.logical_and(masked >= rowmax, member > 0.0)
    idx = jnp.min(jnp.where(cand, midx, n), axis=1, keepdims=True)
    sel = (midx == idx).astype(f32)                                           # (K, N)

    # ONE stacked MXU pass (f32) for moments + picked point, both contracted over N
    momop = jnp.concatenate([coords, coords * coords, energy,
                             jnp.ones_like(energy)], axis=0)                  # (8, N)
    pick_src = jnp.concatenate([coords + points[0:3, :], soft0, soft1],
                               axis=0)                                        # (5, N)
    lhs = jnp.concatenate([member, sel], axis=0)                              # (2K, N)
    rhs = jnp.concatenate([momop, pick_src], axis=0)                          # (13, N)
    merged = lax.dot_general(lhs, rhs, (((1,), (1,)), ((), ())),
                             preferred_element_type=f32)                      # (2K, 13)
    mom = merged[:K, :8]
    picked = merged[K:, 8:]

    counts = mom[:, 7:8]
    inv = pl.reciprocal(jnp.maximum(counts, 1.0), approx=True)
    centroid = mom[:, 0:3] * inv
    var = mom[:, 3:6] * inv - centroid * centroid
    emean = mom[:, 6:7] * inv
    geo = jnp.concatenate([centroid, var, emean, jnp.log(counts + 1.0)], axis=1)
    node_enc = jnp.maximum(jnp.dot(geo, wn_ref[...],
                                   preferred_element_type=f32) + bn_ref[...], 0.0)

    start = picked[:, 0:3] + 0.5
    sc = picked[:, 3:5]
    # TODO(synk): cluster_direction() (max-dist window / optimised start dir) is
    # simplified to normalize(centroid - start).
    dvec = centroid - start
    direction = dvec * lax.rsqrt(jnp.sum(dvec * dvec, axis=1, keepdims=True) + 1e-12)
    x_nodes = jnp.concatenate([node_enc, start, direction, sc], axis=1)       # (K, 24)

    # ---- stage 3: GNN (edge encoder + edge / node predictors), all f32 ----
    sd = sd_ref[...]                                                          # (2E, K)
    xc = jnp.concatenate([x_nodes, centroid], axis=1)                         # (K, 27)
    gathered = jnp.dot(sd, xc, preferred_element_type=f32)                    # (2E, 27)
    g_src = gathered[:n_edges]
    g_dst = gathered[n_edges:]
    x_src, c_src = g_src[:, :NODE_DIM], g_src[:, NODE_DIM:]
    x_dst, c_dst = g_dst[:, :NODE_DIM], g_dst[:, NODE_DIM:]
    delta = c_dst - c_src
    dist = jnp.sqrt(jnp.sum(delta * delta, axis=1, keepdims=True) + 1e-12)
    mid = 0.5 * (c_src + c_dst)
    efeat = jnp.concatenate([delta, dist, mid, jnp.ones_like(dist)], axis=1)  # (E, 8)

    edge_in = jnp.concatenate([x_src, x_dst, efeat], axis=1)                  # (E, 56)
    msg = jnp.maximum(jnp.dot(edge_in, wm_ref[...],
                              preferred_element_type=f32) + bm_ref[...], 0.0)
    edge_pred = jnp.dot(msg, we_ref[...],
                        preferred_element_type=f32) + be_ref[...]             # (E, 2)

    # aggregation D^T @ msg with the transpose folded into the dot_general
    d_onehot = sd[n_edges:]                                                   # (E, K)
    agg = lax.dot_general(d_onehot, msg, (((0,), (0,)), ((), ())),
                          preferred_element_type=f32)                         # (K, 32)
    node_in = jnp.concatenate([x_nodes, agg], axis=1)                         # (K, 56)
    hn = jnp.maximum(jnp.dot(node_in, wn1_ref[...],
                             preferred_element_type=f32) + bn1_ref[...], 0.0)
    node_pred = jnp.dot(hn, wn2_ref[...],
                        preferred_element_type=f32) + bn2_ref[...]            # (K, 2)

    # ---- outputs ----
    # voxel slab: channel-major (16, N) -- lane-dense (N multiple of 128), no big pad
    vox_ref[...] = jnp.concatenate(
        [head, semantic.astype(f32), keep_row,
         jnp.zeros((VOX_ROWS - HEAD_C - 2, n), f32)], axis=0)                 # (16, N)

    # cluster + edge slab: narrow (K + E_pad, 32)
    node_rows = jnp.concatenate(
        [node_pred, x_nodes, jnp.zeros((K, KE_W - 2 - NODE_DIM), f32)], axis=1)
    edge_rows = jnp.concatenate(
        [edge_pred, jnp.zeros((n_edges, KE_W - 2), f32)], axis=1)
    ke_ref[...] = jnp.concatenate([node_rows, edge_rows], axis=0)             # (K+E, 32)


def fused_chain(data_t, member_base, sd, params, n_edges):
    vmem = pl.BlockSpec(memory_space=pltpu.MemorySpace.VMEM)
    f32, bf16 = jnp.float32, jnp.bfloat16
    # fold the 1/16 coordinate scale into w1; transpose backbone weights for the
    # channel-major layout; only the two backbone matmuls use bf16 operands.
    scale = jnp.array([[1.0 / 16.0], [1.0 / 16.0], [1.0 / 16.0], [1.0]], f32)  # (4, 1)
    w1t = (params["w1"] * scale).T.astype(bf16)                                 # (HID, 4)
    b1c = params["b1"].T                                                        # (HID, 1)
    w2t = params["w2"].T.astype(bf16)                                           # (12, HID)
    b2c = params["b2"].T                                                        # (12, 1)
    kernel = functools.partial(_fused_kernel, n_edges)
    return pl.pallas_call(
        kernel,
        out_shape=(jax.ShapeDtypeStruct((VOX_ROWS, N_VOX), jnp.float32),
                   jax.ShapeDtypeStruct((K + n_edges, KE_W), jnp.float32)),
        in_specs=[vmem] * 17,
        out_specs=(vmem, vmem),
    )(data_t, member_base, sd,
      w1t, b1c, w2t, b2c,
      params["wn"], params["bn"],
      params["wm"], params["bm"], params["we"], params["be"],
      params["wn1"], params["bn1"], params["wn2"], params["bn2"])


# ---------------- deterministic parameter init ----------------
def init_params(key):
    ks = jax.random.split(key, 8)
    w = lambda k, s: (jax.random.normal(k, s, jnp.float32) * 0.1)
    return dict(
        w1=w(ks[0], (4, HID)),             b1=jnp.zeros((1, HID), jnp.float32),
        w2=w(ks[1], (HID, HEAD_C)),        b2=jnp.zeros((1, HEAD_C), jnp.float32),
        wn=w(ks[2], (NODE_GEO, NODE_ENC)), bn=jnp.zeros((1, NODE_ENC), jnp.float32),
        wm=w(ks[3], (2 * NODE_DIM + EDGE_RAW, MSG_DIM)),
        bm=jnp.zeros((1, MSG_DIM), jnp.float32),
        we=w(ks[4], (MSG_DIM, 2)),         be=jnp.zeros((1, 2), jnp.float32),
        wn1=w(ks[5], (NODE_DIM + MSG_DIM, MSG_DIM)),
        bn1=jnp.zeros((1, MSG_DIM), jnp.float32),
        wn2=w(ks[6], (MSG_DIM, 2)),        bn2=jnp.zeros((1, 2), jnp.float32),
    )


# ---------------- numpy glue (graph construction / grouping) ----------------
def complete_graph(batch_ids):
    edges = []
    for b in np.unique(batch_ids):
        idx = np.where(batch_ids == b)[0]
        for a in range(len(idx)):
            for c in range(a + 1, len(idx)):
                edges.append((idx[a], idx[c]))
    if not edges:
        return np.zeros((2, 0), dtype=np.int64)
    return np.asarray(edges, dtype=np.int64).T


def node_assignment(edge_index, edge_labels, n):
    # TODO(synk): union-find grouping is inherently sequential host logic (numpy).
    parent = np.arange(n)

    def find(a):
        while parent[a] != a:
            parent[a] = parent[parent[a]]
            a = parent[a]
        return a

    for k in range(edge_index.shape[1]):
        if edge_labels[k] == 1:
            ri, rj = find(edge_index[0, k]), find(edge_index[1, k])
            if ri != rj:
                parent[rj] = ri
    roots = np.array([find(i) for i in range(n)])
    _, groups = np.unique(roots, return_inverse=True)
    return groups.astype(np.int64)


# ---------------- full forward ----------------
def ghost_chain_forward(data, params, member_base, clust_batch_ids):
    coords = data[:, :3]
    energy = data[:, 4:5]
    data_t = jnp.concatenate([coords, energy], axis=1).T                  # (4, N)

    # host-static graph over synthetic clusters; pad E up to a multiple of 8
    edge_index = complete_graph(clust_batch_ids)                          # (2, E)
    E = int(edge_index.shape[1])
    E_pad = int(np.ceil(max(E, 1) / 8.0) * 8)
    S = np.zeros((E_pad, K), np.float32)
    D = np.zeros((E_pad, K), np.float32)
    if E:
        S[np.arange(E), edge_index[0]] = 1.0
        D[np.arange(E), edge_index[1]] = 1.0
    SD = jnp.asarray(np.concatenate([S, D], axis=0))                      # (2*E_pad, K)

    vox_slab, ke_slab = fused_chain(data_t, member_base, SD, params, E_pad)

    segmentation = vox_slab[0:SEG_C, :].T
    ghost = vox_slab[SEG_C:SEG_C + GHOST_C, :].T
    points = vox_slab[SEG_C + GHOST_C:HEAD_C, :].T
    semantic = vox_slab[HEAD_C, :].astype(jnp.int32)
    deghost = vox_slab[HEAD_C + 1, :] > 0.5

    result = dict(segmentation=[segmentation], points=[points], ghost=[ghost],
                  semantic=[semantic], deghost=[deghost])
    if E == 0:
        return result, edge_index

    node_pred = ke_slab[:K, :2]
    x_nodes = ke_slab[:K, 2:2 + NODE_DIM]
    edge_pred = ke_slab[K:K + E, :2]
    result.update(dict(node_pred=[node_pred], edge_pred=[edge_pred],
                       node_features=[x_nodes]))
    return result, edge_index


if __name__ == "__main__":
    key = jax.random.PRNGKey(0)
    kd, kp = jax.random.split(key)
    kc, ke = jax.random.split(kd)

    coords = jax.random.uniform(kc, (N_VOX, 3), jnp.float32, 0.0, 16.0)
    batch = jnp.concatenate([jnp.zeros((N_VOX // 2,), jnp.float32),
                             jnp.ones((N_VOX // 2,), jnp.float32)])
    energy = jax.random.uniform(ke, (N_VOX, 1), jnp.float32, 0.0, 1.0)
    data = jnp.concatenate([coords, batch[:, None], energy], axis=1)      # (N, 5)

    params = init_params(kp)

    # synthetic DBSCAN fragments: contiguous index blocks within each batch
    member_np = np.zeros((K, N_VOX), dtype=np.float32)
    per = N_VOX // K
    for k in range(K):
        member_np[k, k * per:(k + 1) * per] = 1.0
    member_base = jnp.asarray(member_np)
    clust_batch_ids = np.repeat(np.arange(N_BATCH), K_PER_B)

    result, edge_index = ghost_chain_forward(data, params, member_base, clust_batch_ids)

    # per-batch splitting + group prediction (threshold mode) -- numpy glue
    if "edge_pred" in result:
        edge_pred_np = np.asarray(jax.block_until_ready(result["edge_pred"][0]))
        node_pred_np = np.asarray(jax.block_until_ready(result["node_pred"][0]))
        group_pred, np_split, ep_split, ei_split = [], [], [], []
        for b in range(N_BATCH):
            bcids = np.where(clust_batch_ids == b)[0]
            beids = np.where(clust_batch_ids[edge_index[0]] == b)[0]
            local = {g: i for i, g in enumerate(bcids)}
            if len(beids):
                eidx_local = np.vectorize(local.get)(edge_index[:, beids])
            else:
                eidx_local = np.zeros((2, 0), dtype=np.int64)
            labels = np.argmax(edge_pred_np[beids], axis=1) if len(beids) else np.array([])
            group_pred.append(node_assignment(eidx_local, labels, len(bcids)))
            np_split.append(node_pred_np[bcids])
            ep_split.append(edge_pred_np[beids])
            ei_split.append(eidx_local)
        result.update(dict(group_pred=[group_pred], node_pred=[np_split],
                           edge_pred=[ep_split], edge_index=[ei_split]))

    jax.block_until_ready(result["segmentation"][0])
    jax.block_until_ready(result["points"][0])
    print("KERNEL_OK")
</pallas_src>

<mosaic_0001>
module attributes {stable_mosaic.version = 11 : i64} {
  func.func @_fused_kernel(%arg0: memref<4x256xf32, #tpu.memory_space<vmem>>, %arg1: memref<8x256xf32, #tpu.memory_space<vmem>>, %arg2: memref<32x8xf32, #tpu.memory_space<vmem>>, %arg3: memref<32x4xbf16, #tpu.memory_space<vmem>>, %arg4: memref<32x1xf32, #tpu.memory_space<vmem>>, %arg5: memref<12x32xbf16, #tpu.memory_space<vmem>>, %arg6: memref<12x1xf32, #tpu.memory_space<vmem>>, %arg7: memref<8x16xf32, #tpu.memory_space<vmem>>, %arg8: memref<1x16xf32, #tpu.memory_space<vmem>>, %arg9: memref<56x32xf32, #tpu.memory_space<vmem>>, %arg10: memref<1x32xf32, #tpu.memory_space<vmem>>, %arg11: memref<32x2xf32, #tpu.memory_space<vmem>>, %arg12: memref<1x2xf32, #tpu.memory_space<vmem>>, %arg13: memref<56x32xf32, #tpu.memory_space<vmem>>, %arg14: memref<1x32xf32, #tpu.memory_space<vmem>>, %arg15: memref<32x2xf32, #tpu.memory_space<vmem>>, %arg16: memref<1x2xf32, #tpu.memory_space<vmem>>, %arg17: memref<16x256xf32, #tpu.memory_space<vmem>>, %arg18: memref<24x32xf32, #tpu.memory_space<vmem>>) attributes {dimension_semantics = [], scalar_prefetch = 0 : i64, scratch_operands = 0 : i64, tpu.core_type = #tpu.core_type<tc>} {
    %c0 = arith.constant 0 : index
    %c0_0 = arith.constant 0 : index
    %0 = vector.load %arg0[%c0, %c0_0] : memref<4x256xf32, #tpu.memory_space<vmem>>, vector<4x256xf32>
    %1 = vector.extract_strided_slice %0 {offsets = [0, 0], sizes = [3, 256], strides = [1, 1]} : vector<4x256xf32> to vector<3x256xf32>
    %2 = vector.extract_strided_slice %0 {offsets = [3, 0], sizes = [1, 256], strides = [1, 1]} : vector<4x256xf32> to vector<1x256xf32>
    %c0_1 = arith.constant 0 : index
    %c0_2 = arith.constant 0 : index
    %3 = vector.load %arg3[%c0_1, %c0_2] : memref<32x4xbf16, #tpu.memory_space<vmem>>, vector<32x4xbf16>
    %4 = arith.truncf %0 : vector<4x256xf32> to vector<4x256xbf16>
    %cst = arith.constant dense<0.000000e+00> : vector<32x256xf32>
    %5 = tpu.matmul %3, %4, %cst {dimension_numbers = #tpu.dot_dimension_numbers<[1], [0], [0], [1], [0, 0, 1, 1], [], []>} : vector<32x4xbf16>, vector<4x256xbf16>, vector<32x256xf32> -> vector<32x256xf32>
    %c0_3 = arith.constant 0 : index
    %c0_4 = arith.constant 0 : index
    %6 = vector.load %arg4[%c0_3, %c0_4] : memref<32x1xf32, #tpu.memory_space<vmem>>, vector<32x1xf32>
    %7 = vector.broadcast %6 : vector<32x1xf32> to vector<32x256xf32>
    %8 = arith.addf %5, %7 : vector<32x256xf32>
    %cst_5 = arith.constant 0.000000e+00 : f32
    %9 = vector.broadcast %cst_5 : f32 to vector<32x256xf32>
    %10 = arith.maximumf %8, %9 : vector<32x256xf32>
    %c0_6 = arith.constant 0 : index
    %c0_7 = arith.constant 0 : index
    %11 = vector.load %arg5[%c0_6, %c0_7] : memref<12x32xbf16, #tpu.memory_space<vmem>>, vector<12x32xbf16>
    %12 = arith.truncf %10 : vector<32x256xf32> to vector<32x256xbf16>
    %cst_8 = arith.constant dense<0.000000e+00> : vector<12x256xf32>
    %13 = tpu.matmul %11, %12, %cst_8 {dimension_numbers = #tpu.dot_dimension_numbers<[1], [0], [0], [1], [0, 0, 1, 1], [], []>} : vector<12x32xbf16>, vector<32x256xbf16>, vector<12x256xf32> -> vector<12x256xf32>
    %c0_9 = arith.constant 0 : index
    %c0_10 = arith.constant 0 : index
    %14 = vector.load %arg6[%c0_9, %c0_10] : memref<12x1xf32, #tpu.memory_space<vmem>>, vector<12x1xf32>
    %15 = vector.broadcast %14 : vector<12x1xf32> to vector<12x256xf32>
    %16 = arith.addf %13, %15 : vector<12x256xf32>
    %17 = vector.extract_strided_slice %16 {offsets = [0, 0], sizes = [5, 256], strides = [1, 1]} : vector<12x256xf32> to vector<5x256xf32>
    %18 = vector.extract_strided_slice %16 {offsets = [7, 0], sizes = [5, 256], strides = [1, 1]} : vector<12x256xf32> to vector<5x256xf32>
    %cst_11 = arith.constant dense<0xFF800000> : vector<256xf32>
    %19 = vector.multi_reduction <maximumf>, %17, %cst_11 [0] : vector<5x256xf32> to vector<256xf32>
    %20 = vector.shape_cast %19 : vector<256xf32> to vector<1x256xf32>
    %21 = tpu.iota {dimensions = array<i32: 0>} : vector<5x256xi32>
    %22 = vector.broadcast %20 : vector<1x256xf32> to vector<5x256xf32>
    %23 = arith.cmpf oge, %17, %22 : vector<5x256xf32>
    %c5_i32 = arith.constant 5 : i32
    %24 = vector.broadcast %c5_i32 : i32 to vector<5x256xi32>
    %25 = arith.select %23, %21, %24 : vector<5x256xi1>, vector<5x256xi32>
    %cst_12 = arith.constant dense<2147483647> : vector<256xi32>
    %26 = vector.multi_reduction <minsi>, %25, %cst_12 [0] : vector<5x256xi32> to vector<256xi32>
    %27 = vector.shape_cast %26 : vector<256xi32> to vector<1x256xi32>
    %28 = vector.extract_strided_slice %16 {offsets = [5, 0], sizes = [1, 256], strides = [1, 1]} : vector<12x256xf32> to vector<1x256xf32>
    %29 = vector.extract_strided_slice %16 {offsets = [6, 0], sizes = [1, 256], strides = [1, 1]} : vector<12x256xf32> to vector<1x256xf32>
    %30 = arith.cmpf oge, %28, %29 : vector<1x256xf32>
    %31 = arith.extui %30 : vector<1x256xi1> to vector<1x256xi32>
    %32 = arith.sitofp %31 : vector<1x256xi32> to vector<1x256xf32>
    %33 = vector.extract_strided_slice %18 {offsets = [3, 0], sizes = [1, 256], strides = [1, 1]} : vector<5x256xf32> to vector<1x256xf32>
    %34 = vector.extract_strided_slice %18 {offsets = [4, 0], sizes = [1, 256], strides = [1, 1]} : vector<5x256xf32> to vector<1x256xf32>
    %35 = arith.subf %33, %34 : vector<1x256xf32>
    %36 = math.exp %35 : vector<1x256xf32>
    %cst_13 = arith.constant 1.000000e+00 : f32
    %37 = vector.broadcast %cst_13 : f32 to vector<1x256xf32>
    %38 = arith.addf %37, %36 : vector<1x256xf32>
    %39 = tpu.reciprocal %38 {approx = true} : vector<1x256xf32> -> vector<1x256xf32>
    %40 = arith.mulf %39, %36 : vector<1x256xf32>
    %c0_14 = arith.constant 0 : index
    %c0_15 = arith.constant 0 : index
    %41 = vector.load %arg1[%c0_14, %c0_15] : memref<8x256xf32, #tpu.memory_space<vmem>>, vector<8x256xf32>
    %42 = vector.broadcast %32 : vector<1x256xf32> to vector<8x256xf32>
    %43 = arith.mulf %41, %42 : vector<8x256xf32>
    %cst_16 = arith.constant 0.000000e+00 : f32
    %44 = vector.broadcast %cst_16 : f32 to vector<8x256xf32>
    %45 = arith.cmpf ogt, %43, %44 : vector<8x256xf32>
    %cst_17 = arith.constant -1.000000e+30 : f32
    %46 = vector.shape_cast %39 : vector<1x256xf32> to vector<1x256xf32>
    %47 = vector.broadcast %46 : vector<1x256xf32> to vector<8x256xf32>
    %48 = vector.broadcast %cst_17 : f32 to vector<8x256xf32>
    %49 = arith.select %45, %47, %48 : vector<8x256xi1>, vector<8x256xf32>
    %cst_18 = arith.constant dense<0xFF800000> : vector<8xf32>
    %50 = vector.multi_reduction <maximumf>, %49, %cst_18 [1] : vector<8x256xf32> to vector<8xf32>
    %51 = vector.shape_cast %50 : vector<8xf32> to vector<8x1xf32>
    %52 = tpu.iota {dimensions = array<i32: 1>} : vector<8x256xi32>
    %53 = vector.broadcast %51 : vector<8x1xf32> to vector<8x256xf32>
    %54 = arith.cmpf oge, %49, %53 : vector<8x256xf32>
    %cst_19 = arith.constant 0.000000e+00 : f32
    %55 = vector.broadcast %cst_19 : f32 to vector<8x256xf32>
    %56 = arith.cmpf ogt, %43, %55 : vector<8x256xf32>
    %57 = arith.andi %54, %56 : vector<8x256xi1>
    %c256_i32 = arith.constant 256 : i32
    %58 = vector.broadcast %c256_i32 : i32 to vector<8x256xi32>
    %59 = arith.select %57, %52, %58 : vector<8x256xi1>, vector<8x256xi32>
    %cst_20 = arith.constant dense<2147483647> : vector<8xi32>
    %60 = vector.multi_reduction <minsi>, %59, %cst_20 [1] : vector<8x256xi32> to vector<8xi32>
    %61 = vector.shape_cast %60 : vector<8xi32> to vector<8x1xi32>
    %62 = vector.broadcast %61 : vector<8x1xi32> to vector<8x256xi32>
    %63 = arith.cmpi eq, %52, %62 : vector<8x256xi32>
    %64 = arith.extui %63 : vector<8x256xi1> to vector<8x256xi32>
    %65 = arith.sitofp %64 : vector<8x256xi32> to vector<8x256xf32>
    %66 = arith.mulf %1, %1 : vector<3x256xf32>
    %cst_21 = arith.constant 1.000000e+00 : f32
    %67 = vector.broadcast %cst_21 : f32 to vector<1x256xf32>
    %68 = tpu.concatenate %1, %66, %2, %67 in 0 : vector<3x256xf32>, vector<3x256xf32>, vector<1x256xf32>, vector<1x256xf32> -> vector<8x256xf32>
    %69 = vector.extract_strided_slice %18 {offsets = [0, 0], sizes = [3, 256], strides = [1, 1]} : vector<5x256xf32> to vector<3x256xf32>
    %70 = arith.addf %1, %69 : vector<3x256xf32>
    %71 = tpu.concatenate %70, %40, %39 in 0 : vector<3x256xf32>, vector<1x256xf32>, vector<1x256xf32> -> vector<5x256xf32>
    %72 = tpu.concatenate %43, %65 in 0 : vector<8x256xf32>, vector<8x256xf32> -> vector<16x256xf32>
    %73 = tpu.concatenate %68, %71 in 0 : vector<8x256xf32>, vector<5x256xf32> -> vector<13x256xf32>
    %cst_22 = arith.constant dense<0.000000e+00> : vector<16x13xf32>
    %74 = tpu.matmul %72, %73, %cst_22 {dimension_numbers = #tpu.dot_dimension_numbers<[1], [1], [0], [0], [0, 0, 1, 0], [], []>} : vector<16x256xf32>, vector<13x256xf32>, vector<16x13xf32> -> vector<16x13xf32>
    %75 = vector.extract_strided_slice %74 {offsets = [0, 0], sizes = [8, 8], strides = [1, 1]} : vector<16x13xf32> to vector<8x8xf32>
    %76 = vector.extract_strided_slice %74 {offsets = [8, 8], sizes = [8, 5], strides = [1, 1]} : vector<16x13xf32> to vector<8x5xf32>
    %77 = vector.extract_strided_slice %75 {offsets = [0, 7], sizes = [8, 1], strides = [1, 1]} : vector<8x8xf32> to vector<8x1xf32>
    %cst_23 = arith.constant 1.000000e+00 : f32
    %78 = vector.broadcast %cst_23 : f32 to vector<8x1xf32>
    %79 = arith.maximumf %77, %78 : vector<8x1xf32>
    %80 = tpu.reciprocal %79 {approx = true} : vector<8x1xf32> -> vector<8x1xf32>
    %81 = vector.extract_strided_slice %75 {offsets = [0, 0], sizes = [8, 3], strides = [1, 1]} : vector<8x8xf32> to vector<8x3xf32>
    %82 = vector.broadcast %80 : vector<8x1xf32> to vector<8x3xf32>
    %83 = arith.mulf %81, %82 : vector<8x3xf32>
    %84 = vector.extract_strided_slice %75 {offsets = [0, 3], sizes = [8, 3], strides = [1, 1]} : vector<8x8xf32> to vector<8x3xf32>
    %85 = vector.broadcast %80 : vector<8x1xf32> to vector<8x3xf32>
    %86 = arith.mulf %84, %85 : vector<8x3xf32>
    %87 = arith.mulf %83, %83 : vector<8x3xf32>
    %88 = arith.subf %86, %87 : vector<8x3xf32>
    %89 = vector.extract_strided_slice %75 {offsets = [0, 6], sizes = [8, 1], strides = [1, 1]} : vector<8x8xf32> to vector<8x1xf32>
    %90 = arith.mulf %89, %80 : vector<8x1xf32>
    %cst_24 = arith.constant 1.000000e+00 : f32
    %91 = vector.broadcast %cst_24 : f32 to vector<8x1xf32>
    %92 = arith.addf %77, %91 : vector<8x1xf32>
    %93 = math.log %92 : vector<8x1xf32>
    %94 = tpu.concatenate %83, %88, %90, %93 in 1 : vector<8x3xf32>, vector<8x3xf32>, vector<8x1xf32>, vector<8x1xf32> -> vector<8x8xf32>
    %c0_25 = arith.constant 0 : index
    %c0_26 = arith.constant 0 : index
    %95 = vector.load %arg7[%c0_25, %c0_26] : memref<8x16xf32, #tpu.memory_space<vmem>>, vector<8x16xf32>
    %cst_27 = arith.constant dense<0.000000e+00> : vector<8x16xf32>
    %96 = tpu.matmul %94, %95, %cst_27 {dimension_numbers = #tpu.dot_dimension_numbers<[1], [0], [0], [1], [0, 0, 1, 1], [], []>} : vector<8x8xf32>, vector<8x16xf32>, vector<8x16xf32> -> vector<8x16xf32>
    %c0_28 = arith.constant 0 : index
    %c0_29 = arith.constant 0 : index
    %97 = vector.load %arg8[%c0_28, %c0_29] : memref<1x16xf32, #tpu.memory_space<vmem>>, vector<1x16xf32>
    %98 = vector.broadcast %97 : vector<1x16xf32> to vector<8x16xf32>
    %99 = arith.addf %96, %98 : vector<8x16xf32>
    %cst_30 = arith.constant 0.000000e+00 : f32
    %100 = vector.broadcast %cst_30 : f32 to vector<8x16xf32>
    %101 = arith.maximumf %99, %100 : vector<8x16xf32>
    %102 = vector.extract_strided_slice %76 {offsets = [0, 0], sizes = [8, 3], strides = [1, 1]} : vector<8x5xf32> to vector<8x3xf32>
    %cst_31 = arith.constant 5.000000e-01 : f32
    %103 = vector.broadcast %cst_31 : f32 to vector<8x3xf32>
    %104 = arith.addf %102, %103 : vector<8x3xf32>
    %105 = vector.extract_strided_slice %76 {offsets = [0, 3], sizes = [8, 2], strides = [1, 1]} : vector<8x5xf32> to vector<8x2xf32>
    %106 = arith.subf %83, %104 : vector<8x3xf32>
    %107 = arith.mulf %106, %106 : vector<8x3xf32>
    %cst_32 = arith.constant dense<0.000000e+00> : vector<8xf32>
    %108 = vector.multi_reduction <add>, %107, %cst_32 [1] : vector<8x3xf32> to vector<8xf32>
    %109 = vector.shape_cast %108 : vector<8xf32> to vector<8x1xf32>
    %cst_33 = arith.constant 9.99999996E-13 : f32
    %110 = vector.broadcast %cst_33 : f32 to vector<8x1xf32>
    %111 = arith.addf %109, %110 : vector<8x1xf32>
    %112 = math.rsqrt %111 : vector<8x1xf32>
    %113 = vector.broadcast %112 : vector<8x1xf32> to vector<8x3xf32>
    %114 = arith.mulf %106, %113 : vector<8x3xf32>
    %115 = tpu.concatenate %101, %104, %114, %105 in 1 : vector<8x16xf32>, vector<8x3xf32>, vector<8x3xf32>, vector<8x2xf32> -> vector<8x24xf32>
    %c0_34 = arith.constant 0 : index
    %c0_35 = arith.constant 0 : index
    %116 = vector.load %arg2[%c0_34, %c0_35] : memref<32x8xf32, #tpu.memory_space<vmem>>, vector<32x8xf32>
    %117 = tpu.concatenate %115, %83 in 1 : vector<8x24xf32>, vector<8x3xf32> -> vector<8x27xf32>
    %cst_36 = arith.constant dense<0.000000e+00> : vector<32x27xf32>
    %118 = tpu.matmul %116, %117, %cst_36 {dimension_numbers = #tpu.dot_dimension_numbers<[1], [0], [0], [1], [0, 0, 1, 1], [], []>} : vector<32x8xf32>, vector<8x27xf32>, vector<32x27xf32> -> vector<32x27xf32>
    %119 = vector.extract_strided_slice %118 {offsets = [0, 0], sizes = [16, 27], strides = [1, 1]} : vector<32x27xf32> to vector<16x27xf32>
    %120 = vector.extract_strided_slice %118 {offsets = [16, 0], sizes = [16, 27], strides = [1, 1]} : vector<32x27xf32> to vector<16x27xf32>
    %121 = vector.extract_strided_slice %119 {offsets = [0, 0], sizes = [16, 24], strides = [1, 1]} : vector<16x27xf32> to vector<16x24xf32>
    %122 = vector.extract_strided_slice %119 {offsets = [0, 24], sizes = [16, 3], strides = [1, 1]} : vector<16x27xf32> to vector<16x3xf32>
    %123 = vector.extract_strided_slice %120 {offsets = [0, 0], sizes = [16, 24], strides = [1, 1]} : vector<16x27xf32> to vector<16x24xf32>
    %124 = vector.extract_strided_slice %120 {offsets = [0, 24], sizes = [16, 3], strides = [1, 1]} : vector<16x27xf32> to vector<16x3xf32>
    %125 = arith.subf %124, %122 : vector<16x3xf32>
    %126 = arith.mulf %125, %125 : vector<16x3xf32>
    %cst_37 = arith.constant dense<0.000000e+00> : vector<16xf32>
    %127 = vector.multi_reduction <add>, %126, %cst_37 [1] : vector<16x3xf32> to vector<16xf32>
    %128 = vector.shape_cast %127 : vector<16xf32> to vector<16x1xf32>
    %cst_38 = arith.constant 9.99999996E-13 : f32
    %129 = vector.broadcast %cst_38 : f32 to vector<16x1xf32>
    %130 = arith.addf %128, %129 : vector<16x1xf32>
    %131 = math.sqrt %130 : vector<16x1xf32>
    %132 = arith.addf %122, %124 : vector<16x3xf32>
    %cst_39 = arith.constant 5.000000e-01 : f32
    %133 = vector.broadcast %cst_39 : f32 to vector<16x3xf32>
    %134 = arith.mulf %133, %132 : vector<16x3xf32>
    %cst_40 = arith.constant 1.000000e+00 : f32
    %135 = vector.broadcast %cst_40 : f32 to vector<16x1xf32>
    %136 = tpu.concatenate %125, %131, %134, %135 in 1 : vector<16x3xf32>, vector<16x1xf32>, vector<16x3xf32>, vector<16x1xf32> -> vector<16x8xf32>
    %137 = tpu.concatenate %121, %123, %136 in 1 : vector<16x24xf32>, vector<16x24xf32>, vector<16x8xf32> -> vector<16x56xf32>
    %c0_41 = arith.constant 0 : index
    %c0_42 = arith.constant 0 : index
    %138 = vector.load %arg9[%c0_41, %c0_42] : memref<56x32xf32, #tpu.memory_space<vmem>>, vector<56x32xf32>
    %cst_43 = arith.constant dense<0.000000e+00> : vector<16x32xf32>
    %139 = tpu.matmul %137, %138, %cst_43 {dimension_numbers = #tpu.dot_dimension_numbers<[1], [0], [0], [1], [0, 0, 1, 1], [], []>} : vector<16x56xf32>, vector<56x32xf32>, vector<16x32xf32> -> vector<16x32xf32>
    %c0_44 = arith.constant 0 : index
    %c0_45 = arith.constant 0 : index
    %140 = vector.load %arg10[%c0_44, %c0_45] : memref<1x32xf32, #tpu.memory_space<vmem>>, vector<1x32xf32>
    %141 = vector.broadcast %140 : vector<1x32xf32> to vector<16x32xf32>
    %142 = arith.addf %139, %141 : vector<16x32xf32>
    %cst_46 = arith.constant 0.000000e+00 : f32
    %143 = vector.broadcast %cst_46 : f32 to vector<16x32xf32>
    %144 = arith.maximumf %142, %143 : vector<16x32xf32>
    %c0_47 = arith.constant 0 : index
    %c0_48 = arith.constant 0 : index
    %145 = vector.load %arg11[%c0_47, %c0_48] : memref<32x2xf32, #tpu.memory_space<vmem>>, vector<32x2xf32>
    %cst_49 = arith.constant dense<0.000000e+00> : vector<16x2xf32>
    %146 = tpu.matmul %144, %145, %cst_49 {dimension_numbers = #tpu.dot_dimension_numbers<[1], [0], [0], [1], [0, 0, 1, 1], [], []>} : vector<16x32xf32>, vector<32x2xf32>, vector<16x2xf32> -> vector<16x2xf32>
    %c0_50 = arith.constant 0 : index
    %c0_51 = arith.constant 0 : index
    %147 = vector.load %arg12[%c0_50, %c0_51] : memref<1x2xf32, #tpu.memory_space<vmem>>, vector<1x2xf32>
    %148 = vector.broadcast %147 : vector<1x2xf32> to vector<16x2xf32>
    %149 = arith.addf %146, %148 : vector<16x2xf32>
    %150 = vector.extract_strided_slice %116 {offsets = [16, 0], sizes = [16, 8], strides = [1, 1]} : vector<32x8xf32> to vector<16x8xf32>
    %cst_52 = arith.constant dense<0.000000e+00> : vector<8x32xf32>
    %151 = tpu.matmul %150, %144, %cst_52 {dimension_numbers = #tpu.dot_dimension_numbers<[0], [0], [1], [1], [0, 1, 1, 1], [], []>} : vector<16x8xf32>, vector<16x32xf32>, vector<8x32xf32> -> vector<8x32xf32>
    %152 = tpu.concatenate %115, %151 in 1 : vector<8x24xf32>, vector<8x32xf32> -> vector<8x56xf32>
    %c0_53 = arith.constant 0 : index
    %c0_54 = arith.constant 0 : index
    %153 = vector.load %arg13[%c0_53, %c0_54] : memref<56x32xf32, #tpu.memory_space<vmem>>, vector<56x32xf32>
    %cst_55 = arith.constant dense<0.000000e+00> : vector<8x32xf32>
    %154 = tpu.matmul %152, %153, %cst_55 {dimension_numbers = #tpu.dot_dimension_numbers<[1], [0], [0], [1], [0, 0, 1, 1], [], []>} : vector<8x56xf32>, vector<56x32xf32>, vector<8x32xf32> -> vector<8x32xf32>
    %c0_56 = arith.constant 0 : index
    %c0_57 = arith.constant 0 : index
    %155 = vector.load %arg14[%c0_56, %c0_57] : memref<1x32xf32, #tpu.memory_space<vmem>>, vector<1x32xf32>
    %156 = vector.broadcast %155 : vector<1x32xf32> to vector<8x32xf32>
    %157 = arith.addf %154, %156 : vector<8x32xf32>
    %cst_58 = arith.constant 0.000000e+00 : f32
    %158 = vector.broadcast %cst_58 : f32 to vector<8x32xf32>
    %159 = arith.maximumf %157, %158 : vector<8x32xf32>
    %c0_59 = arith.constant 0 : index
    %c0_60 = arith.constant 0 : index
    %160 = vector.load %arg15[%c0_59, %c0_60] : memref<32x2xf32, #tpu.memory_space<vmem>>, vector<32x2xf32>
    %cst_61 = arith.constant dense<0.000000e+00> : vector<8x2xf32>
    %161 = tpu.matmul %159, %160, %cst_61 {dimension_numbers = #tpu.dot_dimension_numbers<[1], [0], [0], [1], [0, 0, 1, 1], [], []>} : vector<8x32xf32>, vector<32x2xf32>, vector<8x2xf32> -> vector<8x2xf32>
    %c0_62 = arith.constant 0 : index
    %c0_63 = arith.constant 0 : index
    %162 = vector.load %arg16[%c0_62, %c0_63] : memref<1x2xf32, #tpu.memory_space<vmem>>, vector<1x2xf32>
    %163 = vector.broadcast %162 : vector<1x2xf32> to vector<8x2xf32>
    %164 = arith.addf %161, %163 : vector<8x2xf32>
    %165 = arith.sitofp %27 : vector<1x256xi32> to vector<1x256xf32>
    %cst_64 = arith.constant 0.000000e+00 : f32
    %166 = vector.broadcast %cst_64 : f32 to vector<2x256xf32>
    %167 = tpu.concatenate %16, %165, %32, %166 in 0 : vector<12x256xf32>, vector<1x256xf32>, vector<1x256xf32>, vector<2x256xf32> -> vector<16x256xf32>
    %c0_65 = arith.constant 0 : index
    %c0_66 = arith.constant 0 : index
    %168 = vector.load %arg17[%c0_65, %c0_66] : memref<16x256xf32, #tpu.memory_space<vmem>>, vector<16x256xf32>
    tpu.vector_store %arg17[%c0_65, %c0_66], %167 {strides = array<i32>} : memref<16x256xf32, #tpu.memory_space<vmem>>, vector<16x256xf32>,
    %cst_67 = arith.constant 0.000000e+00 : f32
    %169 = vector.broadcast %cst_67 : f32 to vector<8x6xf32>
    %170 = tpu.concatenate %164, %115, %169 in 1 : vector<8x2xf32>, vector<8x24xf32>, vector<8x6xf32> -> vector<8x32xf32>
    %cst_68 = arith.constant 0.000000e+00 : f32
    %171 = vector.broadcast %cst_68 : f32 to vector<16x30xf32>
    %172 = tpu.concatenate %149, %171 in 1 : vector<16x2xf32>, vector<16x30xf32> -> vector<16x32xf32>
    %173 = tpu.concatenate %170, %172 in 0 : vector<8x32xf32>, vector<16x32xf32> -> vector<24x32xf32>
    %c0_69 = arith.constant 0 : index
    %c0_70 = arith.constant 0 : index
    %174 = vector.load %arg18[%c0_69, %c0_70] : memref<24x32xf32, #tpu.memory_space<vmem>>, vector<24x32xf32>
    tpu.vector_store %arg18[%c0_69, %c0_70], %173 {strides = array<i32>} : memref<24x32xf32, #tpu.memory_space<vmem>>, vector<24x32xf32>,
    return
  }
}

</mosaic_0001>

<llo_original>
// kernel: tpu_custom_call.1
$region0: #{tpu_custom_call.1}
  #allocation0 [shape = 'u32[]', space=smem, size = 0x4, offset = 0x4, fixed_abs, tag = 'smem constant byte address 0x4 - core index']
  #allocation1 [shape = 'u32[144,128]{1,0:T(1,128)}', space=vmem, size = 0x12000, scoped, tag = 'internal scratch']
  %s0 = inlined_call_operand.vmem [shape: f32[4,256], index: 0, kind: input, shape index: {}]
  %s1 = inlined_call_operand.vmem [shape: f32[8,256], index: 1, kind: input, shape index: {}]
  %s2 = inlined_call_operand.vmem [shape: f32[32,8], index: 2, kind: input, shape index: {}]
  %s3 = inlined_call_operand.vmem [shape: bf16[32,4], index: 3, kind: input, shape index: {}]
  %s4 = inlined_call_operand.vmem [shape: f32[32,1], index: 4, kind: input, shape index: {}]
  %s5 = inlined_call_operand.vmem [shape: bf16[12,32], index: 5, kind: input, shape index: {}]
  %s6 = inlined_call_operand.vmem [shape: f32[12,1], index: 6, kind: input, shape index: {}]
  %s7 = inlined_call_operand.vmem [shape: f32[8,16], index: 7, kind: input, shape index: {}]
  %s8 = inlined_call_operand.vmem [shape: f32[1,16], index: 8, kind: input, shape index: {}]
  %s9 = inlined_call_operand.vmem [shape: f32[56,32], index: 9, kind: input, shape index: {}]
  %s10 = inlined_call_operand.vmem [shape: f32[1,32], index: 10, kind: input, shape index: {}]
  %s11 = inlined_call_operand.vmem [shape: f32[32,2], index: 11, kind: input, shape index: {}]
  %s12 = inlined_call_operand.vmem [shape: f32[1,2], index: 12, kind: input, shape index: {}]
  %s13 = inlined_call_operand.vmem [shape: f32[56,32], index: 13, kind: input, shape index: {}]
  %s14 = inlined_call_operand.vmem [shape: f32[1,32], index: 14, kind: input, shape index: {}]
  %s15 = inlined_call_operand.vmem [shape: f32[32,2], index: 15, kind: input, shape index: {}]
  %s16 = inlined_call_operand.vmem [shape: f32[1,2], index: 16, kind: input, shape index: {}]
  %s17 = inlined_call_operand.hbm [shape: f32[16,256], index: 17, kind: output, shape index: {0}]
  %s18 = inlined_call_operand.hbm [shape: f32[24,32], index: 18, kind: output, shape index: {1}]
  %19 = xla_tuple %s17, %s18
  %s20 = sld [smem:[#allocation0]]
  $region86: #{tpu_custom_call.1} parent=0
    _
  %s22 = ssub.s32 1, %s20
  %s23 = scalar_select 0, %s22, %s20
  $region1: #{tpu_custom_call.1} parent=0
    #allocation2 [shape = 'u8[16384]{0}', space=vmem, size = 0x4000, scoped, tag = 'output window, operand 0, single buffered']
    #allocation3 [shape = 's32[1]{0}', space=sflag, size = 0x4, scoped, tag = 'scoped memory for tpu_custom_call.1']
    #allocation4 [shape = 'u8[12288]{0}', space=vmem, size = 0x3000, scoped, tag = 'output window, operand 1, single buffered']
    #allocation5 [shape = 's32[1]{0}', space=sflag, size = 0x4, scoped, tag = 'scoped memory for tpu_custom_call.1']
    %24 = vsyncpa [#allocation3], 0
    %25 = vsyncpa [#allocation5], 0
    // Predicated region
    $region2: #{tpu_custom_call.1} parent=1 // pred_check
      _
    $region3: #{tpu_custom_call.1} parent=1 // pred_check_branch
      %27 = sbr.rel (0) target = $region5
    $region4: #{tpu_custom_call.1} parent=1 // pred_region
      _
    $region5: #{tpu_custom_call.1} parent=1 // pred_fallthru
      _
    // Predicated region
    $region6: #{tpu_custom_call.1} parent=1 // pred_check
      _
    $region7: #{tpu_custom_call.1} parent=1 // pred_check_branch
      %29 = sbr.rel (0) target = $region9
    $region8: #{tpu_custom_call.1} parent=1 // pred_region
      _
    $region9: #{tpu_custom_call.1} parent=1 // pred_fallthru
      _
    // Predicated region
    $region10: #{tpu_custom_call.1} parent=1 // pred_check
      _
    $region11: #{tpu_custom_call.1} parent=1 // pred_check_branch
      %31 = sbr.rel (0) target = $region13
    $region12: #{tpu_custom_call.1} parent=1 // pred_region
      _
    $region13: #{tpu_custom_call.1} parent=1 // pred_fallthru
      _
    // Predicated region
    $region14: #{tpu_custom_call.1} parent=1 // pred_check
      _
    $region15: #{tpu_custom_call.1} parent=1 // pred_check_branch
      %33 = sbr.rel (0) target = $region17
    $region16: #{tpu_custom_call.1} parent=1 // pred_region
      _
    $region17: #{tpu_custom_call.1} parent=1 // pred_fallthru
      _
    // Predicated region
    $region18: #{tpu_custom_call.1} parent=1 // pred_check
      _
    $region19: #{tpu_custom_call.1} parent=1 // pred_check_branch
      %35 = sbr.rel (0) target = $region21
    $region20: #{tpu_custom_call.1} parent=1 // pred_region
      _
    $region21: #{tpu_custom_call.1} parent=1 // pred_fallthru
      _
    // Predicated region
    $region22: #{tpu_custom_call.1} parent=1 // pred_check
      _
    $region23: #{tpu_custom_call.1} parent=1 // pred_check_branch
      %37 = sbr.rel (0) target = $region25
    $region24: #{tpu_custom_call.1} parent=1 // pred_region
      _
    $region25: #{tpu_custom_call.1} parent=1 // pred_fallthru
      _
    // Predicated region
    $region26: #{tpu_custom_call.1} parent=1 // pred_check
      _
    $region27: #{tpu_custom_call.1} parent=1 // pred_check_branch
      %39 = sbr.rel (0) target = $region29
    $region28: #{tpu_custom_call.1} parent=1 // pred_region
      _
    $region29: #{tpu_custom_call.1} parent=1 // pred_fallthru
      _
    // Predicated region
    $region30: #{tpu_custom_call.1} parent=1 // pred_check
      _
    $region31: #{tpu_custom_call.1} parent=1 // pred_check_branch
      %41 = sbr.rel (0) target = $region33
    $region32: #{tpu_custom_call.1} parent=1 // pred_region
      _
    $region33: #{tpu_custom_call.1} parent=1 // pred_fallthru
      _
    // Predicated region
    $region34: #{tpu_custom_call.1} parent=1 // pred_check
      _
    $region35: #{tpu_custom_call.1} parent=1 // pred_check_branch
      %43 = sbr.rel (0) target = $region37
    $region36: #{tpu_custom_call.1} parent=1 // pred_region
      _
    $region37: #{tpu_custom_call.1} parent=1 // pred_fallthru
      _
    // Predicated region
    $region38: #{tpu_custom_call.1} parent=1 // pred_check
      _
    $region39: #{tpu_custom_call.1} parent=1 // pred_check_branch
      %45 = sbr.rel (0) target = $region41
    $region40: #{tpu_custom_call.1} parent=1 // pred_region
      _
    $region41: #{tpu_custom_call.1} parent=1 // pred_fallthru
      _
    // Predicated region
    $region42: #{tpu_custom_call.1} parent=1 // pred_check
      _
    $region43: #{tpu_custom_call.1} parent=1 // pred_check_branch
      %47 = sbr.rel (0) target = $region45
    $region44: #{tpu_custom_call.1} parent=1 // pred_region
      _
    $region45: #{tpu_custom_call.1} parent=1 // pred_fallthru
      _
    // Predicated region
    $region46: #{tpu_custom_call.1} parent=1 // pred_check
      _
    $region47: #{tpu_custom_call.1} parent=1 // pred_check_branch
      %49 = sbr.rel (0) target = $region49
    $region48: #{tpu_custom_call.1} parent=1 // pred_region
      _
    $region49: #{tpu_custom_call.1} parent=1 // pred_fallthru
      _
    // Predicated region
    $region50: #{tpu_custom_call.1} parent=1 // pred_check
      _
    $region51: #{tpu_custom_call.1} parent=1 // pred_check_branch
      %51 = sbr.rel (0) target = $region53
    $region52: #{tpu_custom_call.1} parent=1 // pred_region
      _
    $region53: #{tpu_custom_call.1} parent=1 // pred_fallthru
      _
    // Predicated region
    $region54: #{tpu_custom_call.1} parent=1 // pred_check
      _
    $region55: #{tpu_custom_call.1} parent=1 // pred_check_branch
      %53 = sbr.rel (0) target = $region57
    $region56: #{tpu_custom_call.1} parent=1 // pred_region
      _
    $region57: #{tpu_custom_call.1} parent=1 // pred_fallthru
      _
    // Predicated region
    $region58: #{tpu_custom_call.1} parent=1 // pred_check
      _
    $region59: #{tpu_custom_call.1} parent=1 // pred_check_branch
      %55 = sbr.rel (0) target = $region61
    $region60: #{tpu_custom_call.1} parent=1 // pred_region
      _
    $region61: #{tpu_custom_call.1} parent=1 // pred_fallthru
      _
    // Predicated region
    $region62: #{tpu_custom_call.1} parent=1 // pred_check
      _
    $region63: #{tpu_custom_call.1} parent=1 // pred_check_branch
      %57 = sbr.rel (0) target = $region65
    $region64: #{tpu_custom_call.1} parent=1 // pred_region
      _
    $region65: #{tpu_custom_call.1} parent=1 // pred_fallthru
      _
    // Predicated region
    $region66: #{tpu_custom_call.1} parent=1 // pred_check
      _
    $region67: #{tpu_custom_call.1} parent=1 // pred_check_branch
      %59 = sbr.rel (0) target = $region69
    $region68: #{tpu_custom_call.1} parent=1 // pred_region
      _
    $region69: #{tpu_custom_call.1} parent=1 // pred_fallthru
      _
    %v61 = vld [vmem:[%s0] sm:$0xff]
    %v62 = vld [vmem:[%s3] sm:$0xf]
    %v63 = vld [vmem:[%s3 + $0x4] sm:$0xf]
    %v64 = vld [vmem:[%s3 + $0x8] sm:$0xf]
    %v65 = vld [vmem:[%s3 + $0xc] sm:$0xf]
    %v67 = vcombine.high %v61, %v61
    %v69 = vpack.c.bf16 %v61, %v61
    %v70 = vpack.c.bf16 %v67, %v67
    %v71 = vld [vmem:[%s4] sm:$0xff]
    %v72 = vld [vmem:[%s4 + $0x8] sm:$0xff]
    %v73 = vld [vmem:[%s4 + $0x10] sm:$0xff]
    %v74 = vld [vmem:[%s4 + $0x18] sm:$0xff]
    %76 = vset.pattern.permute.xlu0 0
    %77 = vperm.xlu0 %76, %v71
    %v78 = vpop.permute.xlu0 %77
    %81 = vset.pattern.permute.xlu0 0
    %82 = vperm.xlu0 %81, %v72
    %v83 = vpop.permute.xlu0 %82
    %86 = vset.pattern.permute.xlu0 0
    %87 = vperm.xlu0 %86, %v73
    %v88 = vpop.permute.xlu0 %87
    %91 = vset.pattern.permute.xlu0 0
    %92 = vperm.xlu0 %91, %v74
    %v93 = vpop.permute.xlu0 %92
    %v99 = vunpack.c.l.b16 %v62
    %v100 = vunpack.c.l.b16 %v63
    %v101 = vunpack.c.l.b16 %v64
    %v102 = vunpack.c.l.b16 %v65
    %v103 = vpack.c.b16 %v100, %v99
    %v104 = vpack.c.b16 %v102, %v101
    %vm105 = vcmask 31744
    %v107 = vsel %vm105, %v103, 0
    %v110 = vsel %vm105, %v104, 0
    %vm112 = vcmask 1041408
    %v114 = vsel %vm112, %v69, 0
    %v117 = vsel %vm112, %v70, 0
    %119 = vmatprep.subr.bf16.mxu0 %v117
    %120 = vmatpush1.bf16.msra.mxu0 %v114
    %121 = vmatprep.subr.bf16.mxu0 0
    %122 = vmatpush1.bf16.msra.mxu0 0
    %123 = vmatprep.subr.bf16.mxu0 0
    %124 = vmatpush1.bf16.msra.mxu0 0
    %125 = vmatprep.subr.bf16.mxu0 0
    %126 = vmatpush1.bf16.msra.mxu0 0
    %127 = vmatprep.subr.bf16.mxu0 0
    %128 = vmatpush1.bf16.msra.mxu0 0
    %129 = vmatprep.subr.bf16.mxu0 0
    %130 = vmatpush1.bf16.msra.mxu0 0
    %131 = vmatprep.subr.bf16.mxu0 0
    %132 = vmatpush1.bf16.msra.mxu0 0
    %133 = vmatprep.subr.bf16.mxu0 0
    %134 = vmatpush1.bf16.msra.mxu0 0
    %135 = vmatprep.subr.bf16.mxu0 0
    %136 = vmatpush1.bf16.msra.mxu0 0
    %137 = vmatprep.subr.bf16.mxu0 0
    %138 = vmatpush1.bf16.msra.mxu0 0
    %139 = vmatprep.subr.bf16.mxu0 0
    %140 = vmatpush1.bf16.msra.mxu0 0
    %141 = vmatprep.subr.bf16.mxu0 0
    %142 = vmatpush1.bf16.msra.mxu0 0
    %143 = vmatprep.subr.bf16.mxu0 0
    %144 = vmatpush1.bf16.msra.mxu0 0
    %145 = vmatprep.subr.bf16.mxu0 0
    %146 = vmatpush1.bf16.msra.mxu0 0
    %147 = vmatprep.subr.bf16.mxu0 0
    %148 = vmatpush1.bf16.msra.mxu0 0
    %149 = vmatprep.subr.bf16.mxu0 0
    %150 = vmatpush1.bf16.msra.mxu0 0
    %151 = vmatprep.mubr.bf16.mxu0 0
    %152 = vmatmul.mubr.bf16.gmra.mrb[0].mxu0 %v107
    %v153 = vpop.f32.mrb[0].mxu0
    %v154 = vadd.f32 %v78, %v153
    %v155 = vpop.f32.mrb[0].mxu0
    %v156 = vadd.f32 %v78, %v155
    %v157 = vpop.f32.mrb[0].mxu0
    %v158 = vadd.f32 %v83, %v157
    %v159 = vpop.f32.mrb[0].mxu0
    %v160 = vadd.f32 %v83, %v159
    %161 = vmatprep.mubr.bf16.mxu0 0
    %162 = vmatmul.mubr.bf16.gmra.mrb[0].mxu0 %v110
    %v163 = vpop.f32.mrb[0].mxu0
    %v164 = vadd.f32 %v88, %v163
    %v165 = vpop.f32.mrb[0].mxu0
    %v166 = vadd.f32 %v88, %v165
    %v167 = vpop.f32.mrb[0].mxu0
    %v168 = vadd.f32 %v93, %v167
    %v169 = vpop.f32.mrb[0].mxu0
    %v170 = vadd.f32 %v93, %v169
    %171 = vdwg.mxu0
    %v172 = vmax.f32 %v154, 0.0
    %v173 = vmax.f32 %v156, 0.0
    %v174 = vmax.f32 %v158, 0.0
    %v175 = vmax.f32 %v160, 0.0
    %v176 = vmax.f32 %v164, 0.0
    %v177 = vmax.f32 %v166, 0.0
    %v178 = vmax.f32 %v168, 0.0
    %v179 = vmax.f32 %v170, 0.0
    %v180 = vld [vmem:[%s5] sm:$0xf]
    %v181 = vld [vmem:[%s5 + $0x4] sm:$0x3]
    %v182 = vpack.c.bf16 %v174, %v172
    %v183 = vpack.c.bf16 %v175, %v173
    %v184 = vpack.c.bf16 %v178, %v176
    %v185 = vpack.c.bf16 %v179, %v177
    %v186 = vld [vmem:[%s6] sm:$0xff]
    %v187 = vld [vmem:[%s6 + $0x8] sm:$0xf]
    %189 = vset.pattern.permute.xlu0 0
    %190 = vperm.xlu0 %189, %v186
    %v191 = vpop.permute.xlu0 %190
    %194 = vset.pattern.permute.xlu0 0
    %195 = vperm.xlu0 %194, %v187
    %v196 = vpop.permute.xlu0 %195
    %v200 = vunpack.c.l.b16 %v180
    %v201 = vunpack.c.l.b16 %v181
    %v202 = vpack.c.b16 %v201, %v200
    %vm203 = vcmask 261120
    %v205 = vsel %vm203, %v202, 0
    %207 = vmatprep.subr.bf16.mxu0 %v183
    %208 = vmatpush1.bf16.msra.mxu0 %v182
    %209 = vmatprep.subr.bf16.mxu0 %v185
    %210 = vmatpush1.bf16.msra.mxu0 %v184
    %211 = vmatprep.subr.bf16.mxu0 0
    %212 = vmatpush1.bf16.msra.mxu0 0
    %213 = vmatprep.subr.bf16.mxu0 0
    %214 = vmatpush1.bf16.msra.mxu0 0
    %215 = vmatprep.subr.bf16.mxu0 0
    %216 = vmatpush1.bf16.msra.mxu0 0
    %217 = vmatprep.subr.bf16.mxu0 0
    %218 = vmatpush1.bf16.msra.mxu0 0
    %219 = vmatprep.subr.bf16.mxu0 0
    %220 = vmatpush1.bf16.msra.mxu0 0
    %221 = vmatprep.subr.bf16.mxu0 0
    %222 = vmatpush1.bf16.msra.mxu0 0
    %223 = vmatprep.subr.bf16.mxu0 0
    %224 = vmatpush1.bf16.msra.mxu0 0
    %225 = vmatprep.subr.bf16.mxu0 0
    %226 = vmatpush1.bf16.msra.mxu0 0
    %227 = vmatprep.subr.bf16.mxu0 0
    %228 = vmatpush1.bf16.msra.mxu0 0
    %229 = vmatprep.subr.bf16.mxu0 0
    %230 = vmatpush1.bf16.msra.mxu0 0
    %231 = vmatprep.subr.bf16.mxu0 0
    %232 = vmatpush1.bf16.msra.mxu0 0
    %233 = vmatprep.subr.bf16.mxu0 0
    %234 = vmatpush1.bf16.msra.mxu0 0
    %235 = vmatprep.subr.bf16.mxu0 0
    %236 = vmatpush1.bf16.msra.mxu0 0
    %237 = vmatprep.subr.bf16.mxu0 0
    %238 = vmatpush1.bf16.msra.mxu0 0
    %239 = vmatprep.mubr.bf16.mxu0 0
    %240 = vmatmul.mubr.bf16.gmra.mrb[0].mxu0 %v205
    %v241 = vpop.f32.mrb[0].mxu0
    %v242 = vadd.f32 %v191, %v241
    %v243 = vpop.f32.mrb[0].mxu0
    %v244 = vadd.f32 %v191, %v243
    %v245 = vpop.f32.mrb[0].mxu0
    %v246 = vadd.f32 %v196, %v245
    %v247 = vpop.f32.mrb[0].mxu0
    %v248 = vadd.f32 %v196, %v247
    %249 = vdwg.mxu0
    %vm250 = vcmask 1044480
    %v251 = vsel %vm250, %v242, -inf
    %v252 = vrot.slane %v251, 4
    %v253 = vmax.f32 %v251, %v252
    %v254 = vrot.slane %v253, 2
    %v255 = vmax.f32 %v253, %v254
    %v256 = vrot.slane %v255, 1
    %v257 = vmax.f32 %v255, %v256
    %v258 = vsel %vm250, %v244, -inf
    %v259 = vrot.slane %v258, 4
    %v260 = vmax.f32 %v258, %v259
    %v261 = vrot.slane %v260, 2
    %v262 = vmax.f32 %v260, %v261
    %v263 = vrot.slane %v262, 1
    %v264 = vmax.f32 %v262, %v263
    %v265 = vlaneseq
    %v266 = vshrl.u32 %v265, 7
    %vm267 = vcmp.ge.f32.partialorder %v242, %v257
    %vm268 = vcmp.ge.f32.partialorder %v244, %v264
    %v269 = vsel %vm267, %v266, 5
    %v270 = vsel %vm268, %v266, 5
    %v271 = vsel %vm250, %v269, 2147483647
    %v272 = vrot.slane %v271, 4
    %vm273 = vcmp.lt.s32.totalorder %v271, %v272
    %v274 = vsel %vm273, %v271, %v272
    %v275 = vrot.slane %v274, 2
    %vm276 = vcmp.lt.s32.totalorder %v274, %v275
    %v277 = vsel %vm276, %v274, %v275
    %v278 = vrot.slane %v277, 1
    %vm279 = vcmp.lt.s32.totalorder %v277, %v278
    %v280 = vsel %vm279, %v277, %v278
    %v281 = vsel %vm250, %v270, 2147483647
    %v282 = vrot.slane %v281, 4
    %vm283 = vcmp.lt.s32.totalorder %v281, %v282
    %v284 = vsel %vm283, %v281, %v282
    %v285 = vrot.slane %v284, 2
    %vm286 = vcmp.lt.s32.totalorder %v284, %v285
    %v287 = vsel %vm286, %v284, %v285
    %v288 = vrot.slane %v287, 1
    %vm289 = vcmp.lt.s32.totalorder %v287, %v288
    %v290 = vsel %vm289, %v287, %v288
    %v293 = vrot.slane %v242, 1
    %v294 = vrot.slane %v244, 1
    %vm297 = vcmp.ge.f32.partialorder %v242, %v293
    %vm298 = vcmp.ge.f32.partialorder %v244, %v294
    %v299 = vsel %vm297, 1, 0
    %v300 = vsel %vm298, 1, 0
    %v301 = vcvt.s32.f32 %v299
    %v302 = vcvt.s32.f32 %v300
    %v305 = vrot.slane %v246, 1
    %v306 = vrot.slane %v248, 1
    %v309 = vsub.f32 %v246, %v305
    %v310 = vsub.f32 %v248, %v306
    %v311 = vmul.f32 %v309, 1.442695
    %v312 = vpow.pop %v311
    %v313 = vmul.f32 %v310, 1.442695
    %v314 = vpow.pop %v313
    %v315 = vadd.f32 %v312, 1.0
    %v316 = vadd.f32 %v314, 1.0
    %v317 = vrcp.pop %v315
    %v318 = vrcp.pop %v316
    %v319 = vmul.f32 %v317, %v312
    %v320 = vmul.f32 %v318, %v314
    %v321 = vld [vmem:[%s1] sm:$0xff]
    %v322 = vld [vmem:[%s1 + $0x8] sm:$0xff]
    %v323 = vlaneseq
    %v324 = vshrl.u32 %v323, 7
    %v325 = vsub.s32 5, %v324
    %v326 = vrot.slane %v301, %v325
    %v327 = vlaneseq
    %v328 = vshrl.u32 %v327, 7
    %v329 = vsub.s32 5, %v328
    %v330 = vrot.slane %v302, %v329
    %v331 = vmul.f32 %v321, %v326
    %v332 = vmul.f32 %v322, %v330
    %vm333 = vcmp.gt.f32.partialorder %v331, 0.0
    %vm334 = vcmp.gt.f32.partialorder %v332, 0.0
    %v335 = vlaneseq
    %v336 = vshrl.u32 %v335, 7
    %v337 = vsub.s32 2, %v336
    %v338 = vrot.slane %v317, %v337
    %v339 = vlaneseq
    %v340 = vshrl.u32 %v339, 7
    %v341 = vsub.s32 2, %v340
    %v342 = vrot.slane %v318, %v341
    %v343 = vsel %vm333, %v338, -1e+30
    %v344 = vsel %vm334, %v342, -1e+30
    %v345 = vmax.f32 %v343, %v344
    %346 = vmax.xlane.f32.xlu0 %v345
    %v347 = vpop.xlane.xlu0 %346
    %v348 = vlaneseq
    %v349 = vand.u32 %v348, 127
    %v350 = vadd.s32 %v349, 128
    %vm351 = vcmp.ge.f32.partialorder %v343, %v347
    %vm352 = vcmp.ge.f32.partialorder %v344, %v347
    %vm353 = vmand %vm351, %vm333
    %vm354 = vmand %vm352, %vm334
    %v355 = vsel %vm353, %v349, 256
    %v356 = vsel %vm354, %v350, 256
    %vm357 = vcmp.lt.s32.totalorder %v355, %v356
    %v358 = vsel %vm357, %v355, %v356
    %v359 = vand.u32 %v358, 65535
    %v360 = vshra.s32 %v358, 16
    %v361 = vcvt.s32.f32 %v359
    %v362 = vcvt.s32.f32 %v360
    %363 = vmin.xlane.f32.xlu0 %v362
    %v364 = vpop.xlane.xlu0 %363
    %vm365 = vcmp.eq.f32.partialorder %v362, %v364
    %v366 = vsel %vm365, %v361, inf
    %367 = vmin.xlane.f32.xlu0 %v366
    %v368 = vpop.xlane.xlu0 %367
    %v369 = vcvt.f32.s32 %v368
    %v370 = vcvt.f32.s32 %v364
    %v371 = vshll.u32 %v370, 16
    %v372 = vadd.s32 %v371, %v369
    %vm373 = vcmp.eq.s32.totalorder %v349, %v372
    %vm374 = vcmp.eq.s32.totalorder %v350, %v372
    %v375 = vsel %vm373, 1, 0
    %v376 = vsel %vm374, 1, 0
    %v377 = vcvt.s32.f32 %v375
    %v378 = vcvt.s32.f32 %v376
    %v379 = vmul.f32 %v61, %v61
    %v381 = vcombine.high %v379, %v379
    %v382 = vrot.slane %v379, 5
    %v383 = vrot.slane %v381, 5
    %v386 = vlaneseq
    %v387 = vshrl.u32 %v386, 7
    %v388 = vsub.s32 3, %v387
    %v389 = vrot.slane %v61, %v388
    %v390 = vlaneseq
    %v391 = vshrl.u32 %v390, 7
    %v392 = vsub.s32 7, %v391
    %v393 = vrot.slane %v61, %v392
    %vm396 = vcmask 1042432
    %v397 = vsel %vm396, %v61, %v382
    %v398 = vsel %vm396, %v67, %v383
    %vm399 = vcmask 1045504
    %v400 = vsel %vm399, %v397, %v389
    %v401 = vsel %vm399, %v398, %v393
    %vm402 = vcmask 1046528
    %v403 = vsel %vm402, %v400, 1.0
    %v404 = vsel %vm402, %v401, 1.0
    %v405 = vcombine.high %v242, %v244
    %v406 = vcombine.low %v246, %v248
    %vm407 = vcmask 1040384
    %vm408 = vcmask 1044484
    %vm409 = vmor %vm407, %vm408
    %v410 = vrot.slane %v405, 7
    %v411 = vrot.slane %v410, 4
    %v412 = vrot.slane %v406, 7
    %v413 = vsel %vm409, %v411, %v412
    %v415 = vadd.f32 %v61, %v413
    %v417 = vcombine.high %v415, %v415
    %v421 = vrot.slane %v319, 7
    %v422 = vrot.slane %v320, 7
    %v427 = vrot.slane %v317, 6
    %v428 = vrot.slane %v318, 6
    %v431 = vsel %vm396, %v415, %v421
    %v432 = vsel %vm396, %v417, %v422
    %vm433 = vcmask 1043456
    %v434 = vsel %vm433, %v431, %v427
    %v435 = vsel %vm433, %v432, %v428
    %436 = vmatprep.subr.mxu0 %v404
    %437 = vmatpush1.xpose.msra.mxu0 %v403
    %438 = vmatprep.subr.mxu0 %v435
    %439 = vmatpush1.xpose.msra.mxu0 %v434
    %440 = vmatprep.subr.mxu0 0.0
    %441 = vmatpush1.xpose.msra.mxu0 0.0
    %442 = vmatprep.subr.mxu0 0.0
    %443 = vmatpush1.xpose.msra.mxu0 0.0
    %444 = vmatprep.subr.mxu0 0.0
    %445 = vmatpush1.xpose.msra.mxu0 0.0
    %446 = vmatprep.subr.mxu0 0.0
    %447 = vmatpush1.xpose.msra.mxu0 0.0
    %448 = vmatprep.subr.mxu0 0.0
    %449 = vmatpush1.xpose.msra.mxu0 0.0
    %450 = vmatprep.subr.mxu0 0.0
    %451 = vmatpush1.xpose.msra.mxu0 0.0
    %452 = vmatprep.subr.mxu0 0.0
    %453 = vmatpush1.xpose.msra.mxu0 0.0
    %454 = vmatprep.subr.mxu0 0.0
    %455 = vmatpush1.xpose.msra.mxu0 0.0
    %456 = vmatprep.subr.mxu0 0.0
    %457 = vmatpush1.xpose.msra.mxu0 0.0
    %458 = vmatprep.subr.mxu0 0.0
    %459 = vmatpush1.xpose.msra.mxu0 0.0
    %460 = vmatprep.subr.mxu0 0.0
    %461 = vmatpush1.xpose.msra.mxu0 0.0
    %462 = vmatprep.subr.mxu0 0.0
    %463 = vmatpush1.xpose.msra.mxu0 0.0
    %464 = vmatprep.subr.mxu0 0.0
    %465 = vmatpush1.xpose.msra.mxu0 0.0
    %466 = vmatprep.subr.mxu0 0.0
    %467 = vmatpush1.xpose.msra.mxu0 0.0
    %468 = vmatprep.subr.mxu0 0.0
    %469 = vmatpush1.xpose.msra.mxu0 0.0
    %470 = vmatprep.subr.mxu0 0.0
    %471 = vmatpush1.xpose.msra.mxu0 0.0
    %472 = vmatprep.subr.mxu0 0.0
    %473 = vmatpush1.xpose.msra.mxu0 0.0
    %474 = vmatprep.subr.mxu0 0.0
    %475 = vmatpush1.xpose.msra.mxu0 0.0
    %476 = vmatprep.subr.mxu0 0.0
    %477 = vmatpush1.xpose.msra.mxu0 0.0
    %478 = vmatprep.subr.mxu0 0.0
    %479 = vmatpush1.xpose.msra.mxu0 0.0
    %480 = vmatprep.subr.mxu0 0.0
    %481 = vmatpush1.xpose.msra.mxu0 0.0
    %482 = vmatprep.subr.mxu0 0.0
    %483 = vmatpush1.xpose.msra.mxu0 0.0
    %484 = vmatprep.subr.mxu0 0.0
    %485 = vmatpush1.xpose.msra.mxu0 0.0
    %486 = vmatprep.subr.mxu0 0.0
    %487 = vmatpush1.xpose.msra.mxu0 0.0
    %488 = vmatprep.subr.mxu0 0.0
    %489 = vmatpush1.xpose.msra.mxu0 0.0
    %490 = vmatprep.subr.mxu0 0.0
    %491 = vmatpush1.xpose.msra.mxu0 0.0
    %492 = vmatprep.subr.mxu0 0.0
    %493 = vmatpush1.xpose.msra.mxu0 0.0
    %494 = vmatprep.subr.mxu0 0.0
    %495 = vmatpush1.xpose.msra.mxu0 0.0
    %496 = vmatprep.subr.mxu0 0.0
    %497 = vmatpush1.xpose.msra.mxu0 0.0
    %498 = vmatprep.subr.mxu0 0.0
    %499 = vmatpush1.xpose.msra.mxu0 0.0
    %500 = vmatprep.mubr.f32.mxu0 %v332
    %501 = vmatmul.mubr.f32.gmra.mrb[0].mxu0 %v331
    %v502 = vpop.f32.mrb[0].mxu0
    %v503 = vadd.f32 0.0, %v502
    %v504 = vpop.f32.mrb[0].mxu0
    %505 = vmatprep.mubr.f32.mxu0 %v378
    %506 = vmatmul.mubr.f32.gmra.mrb[0].mxu0 %v377
    %v507 = vpop.f32.mrb[0].mxu0
    %v508 = vadd.f32 0.0, %v507
    %v509 = vpop.f32.mrb[0].mxu0
    %510 = vdwg.mxu0
    %v511 = vmax.f32 %v503, 1.0
    %v512 = vrcp.pop %v511
    %514 = vset.pattern.permute.xlu0 7
    %515 = vperm.xlu0 %514, %v512
    %v516 = vpop.permute.xlu0 %515
    %v518 = vmul.f32 %v503, %v516
    %v519 = vmul.f32 %v518, %v518
    %521 = vrot.lane.b32.xlu0 %v519, 3
    %v522 = vpop.permute.xlu0 %521
    %v524 = vsub.f32 %v518, %v522
    %525 = vrot.lane.b32.xlu0 %v512, 127
    %v526 = vpop.permute.xlu0 %525
    %v528 = vmul.f32 %v503, %v526
    %v529 = vadd.f32 %v503, 1.0
    %v530 = vlog2.pop %v529
    %v531 = vmul.f32 %v530, 0.6931472
    %vm532 = vcmask 23552
    %v533 = vsel %vm532, %v518, %v524
    %vm534 = vcmask 48128
    %v535 = vsel %vm534, %v533, %v528
    %vm536 = vcmask 56320
    %v537 = vsel %vm536, %v535, %v531
    %v538 = vld [vmem:[%s7] sm:$0xff]
    %v539 = vld [vmem:[%s8] sm:$0x1]
    %v541 = vlaneseq
    %v542 = vshrl.u32 %v541, 7
    %v543 = vsub.s32 0, %v542
    %v544 = vrot.slane %v539, %v543
    %vm546 = vcmask 64512
    %v548 = vsel %vm546, %v537, 0
    %550 = vmatprep.subr.mxu0 0.0
    %551 = vmatpush1.msra.mxu0 %v538
    %552 = vmatprep.subr.mxu0 0.0
    %553 = vmatpush1.msra.mxu0 0.0
    %554 = vmatprep.subr.mxu0 0.0
    %555 = vmatpush1.msra.mxu0 0.0
    %556 = vmatprep.subr.mxu0 0.0
    %557 = vmatpush1.msra.mxu0 0.0
    %558 = vmatprep.subr.mxu0 0.0
    %559 = vmatpush1.msra.mxu0 0.0
    %560 = vmatprep.subr.mxu0 0.0
    %561 = vmatpush1.msra.mxu0 0.0
    %562 = vmatprep.subr.mxu0 0.0
    %563 = vmatpush1.msra.mxu0 0.0
    %564 = vmatprep.subr.mxu0 0.0
    %565 = vmatpush1.msra.mxu0 0.0
    %566 = vmatprep.subr.mxu0 0.0
    %567 = vmatpush1.msra.mxu0 0.0
    %568 = vmatprep.subr.mxu0 0.0
    %569 = vmatpush1.msra.mxu0 0.0
    %570 = vmatprep.subr.mxu0 0.0
    %571 = vmatpush1.msra.mxu0 0.0
    %572 = vmatprep.subr.mxu0 0.0
    %573 = vmatpush1.msra.mxu0 0.0
    %574 = vmatprep.subr.mxu0 0.0
    %575 = vmatpush1.msra.mxu0 0.0
    %576 = vmatprep.subr.mxu0 0.0
    %577 = vmatpush1.msra.mxu0 0.0
    %578 = vmatprep.subr.mxu0 0.0
    %579 = vmatpush1.msra.mxu0 0.0
    %580 = vmatprep.subr.mxu0 0.0
    %581 = vmatpush1.msra.mxu0 0.0
    %582 = vmatprep.subr.mxu0 0.0
    %583 = vmatpush1.msra.mxu0 0.0
    %584 = vmatprep.subr.mxu0 0.0
    %585 = vmatpush1.msra.mxu0 0.0
    %586 = vmatprep.subr.mxu0 0.0
    %587 = vmatpush1.msra.mxu0 0.0
    %588 = vmatprep.subr.mxu0 0.0
    %589 = vmatpush1.msra.mxu0 0.0
    %590 = vmatprep.subr.mxu0 0.0
    %591 = vmatpush1.msra.mxu0 0.0
    %592 = vmatprep.subr.mxu0 0.0
    %593 = vmatpush1.msra.mxu0 0.0
    %594 = vmatprep.subr.mxu0 0.0
    %595 = vmatpush1.msra.mxu0 0.0
    %596 = vmatprep.subr.mxu0 0.0
    %597 = vmatpush1.msra.mxu0 0.0
    %598 = vmatprep.subr.mxu0 0.0
    %599 = vmatpush1.msra.mxu0 0.0
    %600 = vmatprep.subr.mxu0 0.0
    %601 = vmatpush1.msra.mxu0 0.0
    %602 = vmatprep.subr.mxu0 0.0
    %603 = vmatpush1.msra.mxu0 0.0
    %604 = vmatprep.subr.mxu0 0.0
    %605 = vmatpush1.msra.mxu0 0.0
    %606 = vmatprep.subr.mxu0 0.0
    %607 = vmatpush1.msra.mxu0 0.0
    %608 = vmatprep.subr.mxu0 0.0
    %609 = vmatpush1.msra.mxu0 0.0
    %610 = vmatprep.subr.mxu0 0.0
    %611 = vmatpush1.msra.mxu0 0.0
    %612 = vmatprep.subr.mxu0 0.0
    %613 = vmatpush1.msra.mxu0 0.0
    %614 = vmatprep.mubr.f32.mxu0 0.0
    %615 = vmatmul.mubr.f32.gmra.mrb[0].mxu0 %v548
    %v616 = vpop.f32.mrb[0].mxu0
    %v617 = vadd.f32 %v544, %v616
    %v618 = vpop.f32.mrb[0].mxu0
    %619 = vdwg.mxu0
    %v620 = vmax.f32 %v617, 0.0
    %v621 = vadd.f32 %v508, 0.5
    %623 = vrot.lane.b32.xlu0 %v621, 120
    %v624 = vpop.permute.xlu0 %623
    %v626 = vsub.f32 %v518, %v624
    %v627 = vmul.f32 %v626, %v626
    %v628 = vsel %vm532, %v627, 0.0
    %629 = vadd.xlane.f32.xlu0 %v628
    %v630 = vpop.xlane.xlu0 %629
    %v631 = vadd.f32 %v630, 1e-12
    %v632 = vrsqrt.pop %v631
    %v633 = vmul.f32 %v626, %v632
    %634 = vrot.lane.b32.xlu0 %v621, 8
    %v635 = vpop.permute.xlu0 %634
    %638 = vrot.lane.b32.xlu0 %v633, 19
    %v639 = vpop.permute.xlu0 %638
    %642 = vrot.lane.b32.xlu0 %v508, 11
    %v643 = vpop.permute.xlu0 %642
    %vm645 = vcmask 130048
    %v646 = vsel %vm645, %v620, %v635
    %vm647 = vcmask 154624
    %v648 = vsel %vm647, %v646, %v639
    %vm649 = vcmask 179200
    %v650 = vsel %vm649, %v648, %v643
    %v651 = vld [vmem:[%s2] sm:$0xff]
    %v652 = vld [vmem:[%s2 + $0x8] sm:$0xff]
    %v653 = vld [vmem:[%s2 + $0x10] sm:$0xff]
    %v654 = vld [vmem:[%s2 + $0x18] sm:$0xff]
    %656 = vrot.lane.b32.xlu0 %v518, 24
    %v657 = vpop.permute.xlu0 %656
    %vm659 = vcmask 195584
    %v660 = vsel %vm659, %v650, %v657
    %v662 = vsel %vm546, %v651, 0
    %v665 = vsel %vm546, %v652, 0
    %v668 = vsel %vm546, %v653, 0
    %v671 = vsel %vm546, %v654, 0
    %673 = vmatprep.subr.mxu0 0.0
    %674 = vmatpush1.msra.mxu0 %v660
    %675 = vmatprep.subr.mxu0 0.0
    %676 = vmatpush1.msra.mxu0 0.0
    %677 = vmatprep.subr.mxu0 0.0
    %678 = vmatpush1.msra.mxu0 0.0
    %679 = vmatprep.subr.mxu0 0.0
    %680 = vmatpush1.msra.mxu0 0.0
    %681 = vmatprep.subr.mxu0 0.0
    %682 = vmatpush1.msra.mxu0 0.0
    %683 = vmatprep.subr.mxu0 0.0
    %684 = vmatpush1.msra.mxu0 0.0
    %685 = vmatprep.subr.mxu0 0.0
    %686 = vmatpush1.msra.mxu0 0.0
    %687 = vmatprep.subr.mxu0 0.0
    %688 = vmatpush1.msra.mxu0 0.0
    %689 = vmatprep.subr.mxu0 0.0
    %690 = vmatpush1.msra.mxu0 0.0
    %691 = vmatprep.subr.mxu0 0.0
    %692 = vmatpush1.msra.mxu0 0.0
    %693 = vmatprep.subr.mxu0 0.0
    %694 = vmatpush1.msra.mxu0 0.0
    %695 = vmatprep.subr.mxu0 0.0
    %696 = vmatpush1.msra.mxu0 0.0
    %697 = vmatprep.subr.mxu0 0.0
    %698 = vmatpush1.msra.mxu0 0.0
    %699 = vmatprep.subr.mxu0 0.0
    %700 = vmatpush1.msra.mxu0 0.0
    %701 = vmatprep.subr.mxu0 0.0
    %702 = vmatpush1.msra.mxu0 0.0
    %703 = vmatprep.subr.mxu0 0.0
    %704 = vmatpush1.msra.mxu0 0.0
    %705 = vmatprep.subr.mxu0 0.0
    %706 = vmatpush1.msra.mxu0 0.0
    %707 = vmatprep.subr.mxu0 0.0
    %708 = vmatpush1.msra.mxu0 0.0
    %709 = vmatprep.subr.mxu0 0.0
    %710 = vmatpush1.msra.mxu0 0.0
    %711 = vmatprep.subr.mxu0 0.0
    %712 = vmatpush1.msra.mxu0 0.0
    %713 = vmatprep.subr.mxu0 0.0
    %714 = vmatpush1.msra.mxu0 0.0
    %715 = vmatprep.subr.mxu0 0.0
    %716 = vmatpush1.msra.mxu0 0.0
    %717 = vmatprep.subr.mxu0 0.0
    %718 = vmatpush1.msra.mxu0 0.0
    %719 = vmatprep.subr.mxu0 0.0
    %720 = vmatpush1.msra.mxu0 0.0
    %721 = vmatprep.subr.mxu0 0.0
    %722 = vmatpush1.msra.mxu0 0.0
    %723 = vmatprep.subr.mxu0 0.0
    %724 = vmatpush1.msra.mxu0 0.0
    %725 = vmatprep.subr.mxu0 0.0
    %726 = vmatpush1.msra.mxu0 0.0
    %727 = vmatprep.subr.mxu0 0.0
    %728 = vmatpush1.msra.mxu0 0.0
    %729 = vmatprep.subr.mxu0 0.0
    %730 = vmatpush1.msra.mxu0 0.0
    %731 = vmatprep.subr.mxu0 0.0
    %732 = vmatpush1.msra.mxu0 0.0
    %733 = vmatprep.subr.mxu0 0.0
    %734 = vmatpush1.msra.mxu0 0.0
    %735 = vmatprep.subr.mxu0 0.0
    %736 = vmatpush1.msra.mxu0 0.0
    %737 = vmatprep.mubr.f32.mxu0 0.0
    %738 = vmatmul.mubr.f32.gmra.mrb[0].mxu0 %v662
    %v739 = vpop.f32.mrb[0].mxu0
    %v740 = vadd.f32 0.0, %v739
    %v741 = vpop.f32.mrb[0].mxu0
    %742 = vmatprep.mubr.f32.mxu0 0.0
    %743 = vmatmul.mubr.f32.gmra.mrb[0].mxu0 %v665
    %v744 = vpop.f32.mrb[0].mxu0
    %v745 = vadd.f32 0.0, %v744
    %v746 = vpop.f32.mrb[0].mxu0
    %747 = vmatprep.mubr.f32.mxu0 0.0
    %748 = vmatmul.mubr.f32.gmra.mrb[0].mxu0 %v668
    %v749 = vpop.f32.mrb[0].mxu0
    %v750 = vadd.f32 0.0, %v749
    %v751 = vpop.f32.mrb[0].mxu0
    %752 = vmatprep.mubr.f32.mxu0 0.0
    %753 = vmatmul.mubr.f32.gmra.mrb[0].mxu0 %v671
    %v754 = vpop.f32.mrb[0].mxu0
    %v755 = vadd.f32 0.0, %v754
    %v756 = vpop.f32.mrb[0].mxu0
    %757 = vdwg.mxu0
    %v758 = vsub.f32 %v750, %v740
    %v759 = vsub.f32 %v755, %v745
    %v760 = vmul.f32 %v758, %v758
    %v761 = vmul.f32 %v759, %v759
    %764 = vrot.lane.b32.xlu0 %v760, 104
    %v765 = vpop.permute.xlu0 %764
    %766 = vrot.lane.b32.xlu0 %v761, 104
    %v767 = vpop.permute.xlu0 %766
    %v770 = vsel %vm532, %v765, 0.0
    %771 = vadd.xlane.f32.xlu0 %v770
    %v772 = vpop.xlane.xlu0 %771
    %v773 = vsel %vm532, %v767, 0.0
    %774 = vadd.xlane.f32.xlu0 %v773
    %v775 = vpop.xlane.xlu0 %774
    %v776 = vadd.f32 %v772, 1e-12
    %v777 = vadd.f32 %v775, 1e-12
    %v778 = vrsqrt.pop %v776
    %v779 = vmul.f32 %v776, %v778
    %vm780 = vcmp.eq.f32.partialorder %v776, inf
    %v781 = vsel %vm780, %v776, %v779
    %vm782 = vcmp.eq.f32.partialorder %v776, 0.0
    %v783 = vand.u32 %v776, 2147483648
    %v784 = vsel %vm782, %v783, %v781
    %v785 = vrsqrt.pop %v777
    %v786 = vmul.f32 %v777, %v785
    %vm787 = vcmp.eq.f32.partialorder %v777, inf
    %v788 = vsel %vm787, %v777, %v786
    %vm789 = vcmp.eq.f32.partialorder %v777, 0.0
    %v790 = vand.u32 %v777, 2147483648
    %v791 = vsel %vm789, %v790, %v788
    %v792 = vadd.f32 %v740, %v750
    %v793 = vadd.f32 %v745, %v755
    %v794 = vmul.f32 %v792, 0.5
    %v795 = vmul.f32 %v793, 0.5
    %798 = vrot.lane.b32.xlu0 %v758, 104
    %v799 = vpop.permute.xlu0 %798
    %800 = vrot.lane.b32.xlu0 %v759, 104
    %v801 = vpop.permute.xlu0 %800
    %806 = vrot.lane.b32.xlu0 %v794, 108
    %v807 = vpop.permute.xlu0 %806
    %808 = vrot.lane.b32.xlu0 %v795, 108
    %v809 = vpop.permute.xlu0 %808
    %v812 = vsel %vm532, %v799, %v784
    %v813 = vsel %vm532, %v801, %v791
    %v814 = vsel %vm105, %v812, %v807
    %v815 = vsel %vm105, %v813, %v809
    %v816 = vsel %vm536, %v814, 1.0
    %v817 = vsel %vm536, %v815, 1.0
    %820 = vrot.lane.b32.xlu0 %v750, 24
    %v821 = vpop.permute.xlu0 %820
    %822 = vrot.lane.b32.xlu0 %v755, 24
    %v823 = vpop.permute.xlu0 %822
    %828 = vrot.lane.b32.xlu0 %v816, 48
    %v829 = vpop.permute.xlu0 %828
    %830 = vrot.lane.b32.xlu0 %v817, 48
    %v831 = vpop.permute.xlu0 %830
    %v834 = vsel %vm659, %v740, %v821
    %v835 = vsel %vm659, %v745, %v823
    %vm836 = vcmask 392192
    %v837 = vsel %vm836, %v834, %v829
    %v838 = vsel %vm836, %v835, %v831
    %v839 = vld [vmem:[%s9] sm:$0xff]
    %v840 = vld [vmem:[%s9 + $0x8] sm:$0xff]
    %v841 = vld [vmem:[%s9 + $0x10] sm:$0xff]
    %v842 = vld [vmem:[%s9 + $0x18] sm:$0xff]
    %v843 = vld [vmem:[%s9 + $0x20] sm:$0xff]
    %v844 = vld [vmem:[%s9 + $0x28] sm:$0xff]
    %v845 = vld [vmem:[%s9 + $0x30] sm:$0xff]
    %v846 = vld [vmem:[%s10] sm:$0x1]
    %v848 = vlaneseq
    %v849 = vshrl.u32 %v848, 7
    %v850 = vsub.s32 0, %v849
    %v851 = vrot.slane %v846, %v850
    %vm853 = vcmask 457728
    %v855 = vsel %vm853, %v837, 0
    %v858 = vsel %vm853, %v838, 0
    %860 = vmatprep.subr.mxu0 0.0
    %861 = vmatpush1.msra.mxu0 %v839
    %862 = vmatprep.subr.mxu0 0.0
    %863 = vmatpush1.msra.mxu0 %v840
    %864 = vmatprep.subr.mxu0 0.0
    %865 = vmatpush1.msra.mxu0 %v841
    %866 = vmatprep.subr.mxu0 0.0
    %867 = vmatpush1.msra.mxu0 %v842
    %868 = vmatprep.subr.mxu0 0.0
    %869 = vmatpush1.msra.mxu0 %v843
    %870 = vmatprep.subr.mxu0 0.0
    %871 = vmatpush1.msra.mxu0 %v844
    %872 = vmatprep.subr.mxu0 0.0
    %873 = vmatpush1.msra.mxu0 %v845
    %874 = vmatprep.subr.mxu0 0.0
    %875 = vmatpush1.msra.mxu0 0.0
    %876 = vmatprep.subr.mxu0 0.0
    %877 = vmatpush1.msra.mxu0 0.0
    %878 = vmatprep.subr.mxu0 0.0
    %879 = vmatpush1.msra.mxu0 0.0
    %880 = vmatprep.subr.mxu0 0.0
    %881 = vmatpush1.msra.mxu0 0.0
    %882 = vmatprep.subr.mxu0 0.0
    %883 = vmatpush1.msra.mxu0 0.0
    %884 = vmatprep.subr.mxu0 0.0
    %885 = vmatpush1.msra.mxu0 0.0
    %886 = vmatprep.subr.mxu0 0.0
    %887 = vmatpush1.msra.mxu0 0.0
    %888 = vmatprep.subr.mxu0 0.0
    %889 = vmatpush1.msra.mxu0 0.0
    %890 = vmatprep.subr.mxu0 0.0
    %891 = vmatpush1.msra.mxu0 0.0
    %892 = vmatprep.subr.mxu0 0.0
    %893 = vmatpush1.msra.mxu0 0.0
    %894 = vmatprep.subr.mxu0 0.0
    %895 = vmatpush1.msra.mxu0 0.0
    %896 = vmatprep.subr.mxu0 0.0
    %897 = vmatpush1.msra.mxu0 0.0
    %898 = vmatprep.subr.mxu0 0.0
    %899 = vmatpush1.msra.mxu0 0.0
    %900 = vmatprep.subr.mxu0 0.0
    %901 = vmatpush1.msra.mxu0 0.0
    %902 = vmatprep.subr.mxu0 0.0
    %903 = vmatpush1.msra.mxu0 0.0
    %904 = vmatprep.subr.mxu0 0.0
    %905 = vmatpush1.msra.mxu0 0.0
    %906 = vmatprep.subr.mxu0 0.0
    %907 = vmatpush1.msra.mxu0 0.0
    %908 = vmatprep.subr.mxu0 0.0
    %909 = vmatpush1.msra.mxu0 0.0
    %910 = vmatprep.subr.mxu0 0.0
    %911 = vmatpush1.msra.mxu0 0.0
    %912 = vmatprep.subr.mxu0 0.0
    %913 = vmatpush1.msra.mxu0 0.0
    %914 = vmatprep.subr.mxu0 0.0
    %915 = vmatpush1.msra.mxu0 0.0
    %916 = vmatprep.subr.mxu0 0.0
    %917 = vmatpush1.msra.mxu0 0.0
    %918 = vmatprep.subr.mxu0 0.0
    %919 = vmatpush1.msra.mxu0 0.0
    %920 = vmatprep.subr.mxu0 0.0
    %921 = vmatpush1.msra.mxu0 0.0
    %922 = vmatprep.subr.mxu0 0.0
    %923 = vmatpush1.msra.mxu0 0.0
    %924 = vmatprep.mubr.f32.mxu0 0.0
    %925 = vmatmul.mubr.f32.gmra.mrb[0].mxu0 %v855
    %v926 = vpop.f32.mrb[0].mxu0
    %v927 = vadd.f32 %v851, %v926
    %v928 = vpop.f32.mrb[0].mxu0
    %929 = vmatprep.mubr.f32.mxu0 0.0
    %930 = vmatmul.mubr.f32.gmra.mrb[0].mxu0 %v858
    %v931 = vpop.f32.mrb[0].mxu0
    %v932 = vadd.f32 %v851, %v931
    %v933 = vpop.f32.mrb[0].mxu0
    %934 = vdwg.mxu0
    %v935 = vmax.f32 %v927, 0.0
    %v936 = vmax.f32 %v932, 0.0
    %v937 = vld [vmem:[%s11] sm:$0xff]
    %v938 = vld [vmem:[%s11 + $0x8] sm:$0xff]
    %v939 = vld [vmem:[%s11 + $0x10] sm:$0xff]
    %v940 = vld [vmem:[%s11 + $0x18] sm:$0xff]
    %v941 = vld [vmem:[%s12] sm:$0x1]
    %v943 = vlaneseq
    %v944 = vshrl.u32 %v943, 7
    %v945 = vsub.s32 0, %v944
    %v946 = vrot.slane %v941, %v945
    %v949 = vsel %vm203, %v935, 0
    %v952 = vsel %vm203, %v936, 0
    %954 = vmatprep.subr.mxu0 0.0
    %955 = vmatpush1.msra.mxu0 %v937
    %956 = vmatprep.subr.mxu0 0.0
    %957 = vmatpush1.msra.mxu0 %v938
    %958 = vmatprep.subr.mxu0 0.0
    %959 = vmatpush1.msra.mxu0 %v939
    %960 = vmatprep.subr.mxu0 0.0
    %961 = vmatpush1.msra.mxu0 %v940
    %962 = vmatprep.subr.mxu0 0.0
    %963 = vmatpush1.msra.mxu0 0.0
    %964 = vmatprep.subr.mxu0 0.0
    %965 = vmatpush1.msra.mxu0 0.0
    %966 = vmatprep.subr.mxu0 0.0
    %967 = vmatpush1.msra.mxu0 0.0
    %968 = vmatprep.subr.mxu0 0.0
    %969 = vmatpush1.msra.mxu0 0.0
    %970 = vmatprep.subr.mxu0 0.0
    %971 = vmatpush1.msra.mxu0 0.0
    %972 = vmatprep.subr.mxu0 0.0
    %973 = vmatpush1.msra.mxu0 0.0
    %974 = vmatprep.subr.mxu0 0.0
    %975 = vmatpush1.msra.mxu0 0.0
    %976 = vmatprep.subr.mxu0 0.0
    %977 = vmatpush1.msra.mxu0 0.0
    %978 = vmatprep.subr.mxu0 0.0
    %979 = vmatpush1.msra.mxu0 0.0
    %980 = vmatprep.subr.mxu0 0.0
    %981 = vmatpush1.msra.mxu0 0.0
    %982 = vmatprep.subr.mxu0 0.0
    %983 = vmatpush1.msra.mxu0 0.0
    %984 = vmatprep.subr.mxu0 0.0
    %985 = vmatpush1.msra.mxu0 0.0
    %986 = vmatprep.subr.mxu0 0.0
    %987 = vmatpush1.msra.mxu0 0.0
    %988 = vmatprep.subr.mxu0 0.0
    %989 = vmatpush1.msra.mxu0 0.0
    %990 = vmatprep.subr.mxu0 0.0
    %991 = vmatpush1.msra.mxu0 0.0
    %992 = vmatprep.subr.mxu0 0.0
    %993 = vmatpush1.msra.mxu0 0.0
    %994 = vmatprep.subr.mxu0 0.0
    %995 = vmatpush1.msra.mxu0 0.0
    %996 = vmatprep.subr.mxu0 0.0
    %997 = vmatpush1.msra.mxu0 0.0
    %998 = vmatprep.subr.mxu0 0.0
    %999 = vmatpush1.msra.mxu0 0.0
    %1000 = vmatprep.subr.mxu0 0.0
    %1001 = vmatpush1.msra.mxu0 0.0
    %1002 = vmatprep.subr.mxu0 0.0
    %1003 = vmatpush1.msra.mxu0 0.0
    %1004 = vmatprep.subr.mxu0 0.0
    %1005 = vmatpush1.msra.mxu0 0.0
    %1006 = vmatprep.subr.mxu0 0.0
    %1007 = vmatpush1.msra.mxu0 0.0
    %1008 = vmatprep.subr.mxu0 0.0
    %1009 = vmatpush1.msra.mxu0 0.0
    %1010 = vmatprep.subr.mxu0 0.0
    %1011 = vmatpush1.msra.mxu0 0.0
    %1012 = vmatprep.subr.mxu0 0.0
    %1013 = vmatpush1.msra.mxu0 0.0
    %1014 = vmatprep.subr.mxu0 0.0
    %1015 = vmatpush1.msra.mxu0 0.0
    %1016 = vmatprep.subr.mxu0 0.0
    %1017 = vmatpush1.msra.mxu0 0.0
    %1018 = vmatprep.mubr.f32.mxu0 0.0
    %1019 = vmatmul.mubr.f32.gmra.mrb[0].mxu0 %v949
    %v1020 = vpop.f32.mrb[0].mxu0
    %v1021 = vadd.f32 %v946, %v1020
    %v1022 = vpop.f32.mrb[0].mxu0
    %1023 = vmatprep.mubr.f32.mxu0 0.0
    %1024 = vmatmul.mubr.f32.gmra.mrb[0].mxu0 %v952
    %v1025 = vpop.f32.mrb[0].mxu0
    %v1026 = vadd.f32 %v946, %v1025
    %v1027 = vpop.f32.mrb[0].mxu0
    %1028 = vdwg.mxu0
    %1029 = vxpose.xlu0.b32.start [1/16] %v653, 128
    %1030 = vxpose.xlu0.b32.cont [2/16] %v654, 128
    %1031 = vxpose.xlu0.b32.cont [3/16] 0.0, 128
    %1032 = vxpose.xlu0.b32.cont [4/16] 0.0, 128
    %1033 = vxpose.xlu0.b32.cont [5/16] 0.0, 128
    %1034 = vxpose.xlu0.b32.cont [6/16] 0.0, 128
    %1035 = vxpose.xlu0.b32.cont [7/16] 0.0, 128
    %1036 = vxpose.xlu0.b32.cont [8/16] 0.0, 128
    %1037 = vxpose.xlu0.b32.cont [9/16] 0.0, 128
    %1038 = vxpose.xlu0.b32.cont [10/16] 0.0, 128
    %1039 = vxpose.xlu0.b32.cont [11/16] 0.0, 128
    %1040 = vxpose.xlu0.b32.cont [12/16] 0.0, 128
    %1041 = vxpose.xlu0.b32.cont [13/16] 0.0, 128
    %1042 = vxpose.xlu0.b32.cont [14/16] 0.0, 128
    %1043 = vxpose.xlu0.b32.cont [15/16] 0.0, 128
    %1044 = vxpose.xlu0.b32.end [16/16] 0.0, 128
    %v1045 = vpop.trf.xlu0
    %v1046 = vpop.trf.xlu0
    %v1047 = vpop.trf.xlu0
    %v1048 = vpop.trf.xlu0
    %v1049 = vpop.trf.xlu0
    %v1050 = vpop.trf.xlu0
    %v1051 = vpop.trf.xlu0
    %v1052 = vpop.trf.xlu0
    %v1053 = vpop.trf.xlu0
    %v1054 = vpop.trf.xlu0
    %v1055 = vpop.trf.xlu0
    %v1056 = vpop.trf.xlu0
    %v1057 = vpop.trf.xlu0
    %v1058 = vpop.trf.xlu0
    %v1059 = vpop.trf.xlu0
    %v1060 = vpop.trf.xlu0
    %v1062 = vsel %vm645, %v1045, 0
    %1064 = vmatprep.subr.mxu0 0.0
    %1065 = vmatpush1.msra.mxu0 %v935
    %1066 = vmatprep.subr.mxu0 0.0
    %1067 = vmatpush1.msra.mxu0 %v936
    %1068 = vmatprep.subr.mxu0 0.0
    %1069 = vmatpush1.msra.mxu0 0.0
    %1070 = vmatprep.subr.mxu0 0.0
    %1071 = vmatpush1.msra.mxu0 0.0
    %1072 = vmatprep.subr.mxu0 0.0
    %1073 = vmatpush1.msra.mxu0 0.0
    %1074 = vmatprep.subr.mxu0 0.0
    %1075 = vmatpush1.msra.mxu0 0.0
    %1076 = vmatprep.subr.mxu0 0.0
    %1077 = vmatpush1.msra.mxu0 0.0
    %1078 = vmatprep.subr.mxu0 0.0
    %1079 = vmatpush1.msra.mxu0 0.0
    %1080 = vmatprep.subr.mxu0 0.0
    %1081 = vmatpush1.msra.mxu0 0.0
    %1082 = vmatprep.subr.mxu0 0.0
    %1083 = vmatpush1.msra.mxu0 0.0
    %1084 = vmatprep.subr.mxu0 0.0
    %1085 = vmatpush1.msra.mxu0 0.0
    %1086 = vmatprep.subr.mxu0 0.0
    %1087 = vmatpush1.msra.mxu0 0.0
    %1088 = vmatprep.subr.mxu0 0.0
    %1089 = vmatpush1.msra.mxu0 0.0
    %1090 = vmatprep.subr.mxu0 0.0
    %1091 = vmatpush1.msra.mxu0 0.0
    %1092 = vmatprep.subr.mxu0 0.0
    %1093 = vmatpush1.msra.mxu0 0.0
    %1094 = vmatprep.subr.mxu0 0.0
    %1095 = vmatpush1.msra.mxu0 0.0
    %1096 = vmatprep.subr.mxu0 0.0
    %1097 = vmatpush1.msra.mxu0 0.0
    %1098 = vmatprep.subr.mxu0 0.0
    %1099 = vmatpush1.msra.mxu0 0.0
    %1100 = vmatprep.subr.mxu0 0.0
    %1101 = vmatpush1.msra.mxu0 0.0
    %1102 = vmatprep.subr.mxu0 0.0
    %1103 = vmatpush1.msra.mxu0 0.0
    %1104 = vmatprep.subr.mxu0 0.0
    %1105 = vmatpush1.msra.mxu0 0.0
    %1106 = vmatprep.subr.mxu0 0.0
    %1107 = vmatpush1.msra.mxu0 0.0
    %1108 = vmatprep.subr.mxu0 0.0
    %1109 = vmatpush1.msra.mxu0 0.0
    %1110 = vmatprep.subr.mxu0 0.0
    %1111 = vmatpush1.msra.mxu0 0.0
    %1112 = vmatprep.subr.mxu0 0.0
    %1113 = vmatpush1.msra.mxu0 0.0
    %1114 = vmatprep.subr.mxu0 0.0
    %1115 = vmatpush1.msra.mxu0 0.0
    %1116 = vmatprep.subr.mxu0 0.0
    %1117 = vmatpush1.msra.mxu0 0.0
    %1118 = vmatprep.subr.mxu0 0.0
    %1119 = vmatpush1.msra.mxu0 0.0
    %1120 = vmatprep.subr.mxu0 0.0
    %1121 = vmatpush1.msra.mxu0 0.0
    %1122 = vmatprep.subr.mxu0 0.0
    %1123 = vmatpush1.msra.mxu0 0.0
    %1124 = vmatprep.subr.mxu0 0.0
    %1125 = vmatpush1.msra.mxu0 0.0
    %1126 = vmatprep.subr.mxu0 0.0
    %1127 = vmatpush1.msra.mxu0 0.0
    %1128 = vmatprep.mubr.f32.mxu0 0.0
    %1129 = vmatmul.mubr.f32.gmra.mrb[0].mxu0 %v1062
    %v1130 = vpop.f32.mrb[0].mxu0
    %v1131 = vadd.f32 0.0, %v1130
    %v1132 = vpop.f32.mrb[0].mxu0
    %1133 = vdwg.mxu0
    %1135 = vrot.lane.b32.xlu0 %v1131, 24
    %v1136 = vpop.permute.xlu0 %1135
    %v1138 = vsel %vm659, %v650, %v1136
    %v1139 = vld [vmem:[%s13] sm:$0xff]
    %v1140 = vld [vmem:[%s13 + $0x8] sm:$0xff]
    %v1141 = vld [vmem:[%s13 + $0x10] sm:$0xff]
    %v1142 = vld [vmem:[%s13 + $0x18] sm:$0xff]
    %v1143 = vld [vmem:[%s13 + $0x20] sm:$0xff]
    %v1144 = vld [vmem:[%s13 + $0x28] sm:$0xff]
    %v1145 = vld [vmem:[%s13 + $0x30] sm:$0xff]
    %v1146 = vld [vmem:[%s14] sm:$0x1]
    %v1148 = vlaneseq
    %v1149 = vshrl.u32 %v1148, 7
    %v1150 = vsub.s32 0, %v1149
    %v1151 = vrot.slane %v1146, %v1150
    %v1154 = vsel %vm853, %v1138, 0
    %1156 = vmatprep.subr.mxu0 0.0
    %1157 = vmatpush1.msra.mxu0 %v1139
    %1158 = vmatprep.subr.mxu0 0.0
    %1159 = vmatpush1.msra.mxu0 %v1140
    %1160 = vmatprep.subr.mxu0 0.0
    %1161 = vmatpush1.msra.mxu0 %v1141
    %1162 = vmatprep.subr.mxu0 0.0
    %1163 = vmatpush1.msra.mxu0 %v1142
    %1164 = vmatprep.subr.mxu0 0.0
    %1165 = vmatpush1.msra.mxu0 %v1143
    %1166 = vmatprep.subr.mxu0 0.0
    %1167 = vmatpush1.msra.mxu0 %v1144
    %1168 = vmatprep.subr.mxu0 0.0
    %1169 = vmatpush1.msra.mxu0 %v1145
    %1170 = vmatprep.subr.mxu0 0.0
    %1171 = vmatpush1.msra.mxu0 0.0
    %1172 = vmatprep.subr.mxu0 0.0
    %1173 = vmatpush1.msra.mxu0 0.0
    %1174 = vmatprep.subr.mxu0 0.0
    %1175 = vmatpush1.msra.mxu0 0.0
    %1176 = vmatprep.subr.mxu0 0.0
    %1177 = vmatpush1.msra.mxu0 0.0
    %1178 = vmatprep.subr.mxu0 0.0
    %1179 = vmatpush1.msra.mxu0 0.0
    %1180 = vmatprep.subr.mxu0 0.0
    %1181 = vmatpush1.msra.mxu0 0.0
    %1182 = vmatprep.subr.mxu0 0.0
    %1183 = vmatpush1.msra.mxu0 0.0
    %1184 = vmatprep.subr.mxu0 0.0
    %1185 = vmatpush1.msra.mxu0 0.0
    %1186 = vmatprep.subr.mxu0 0.0
    %1187 = vmatpush1.msra.mxu0 0.0
    %1188 = vmatprep.subr.mxu0 0.0
    %1189 = vmatpush1.msra.mxu0 0.0
    %1190 = vmatprep.subr.mxu0 0.0
    %1191 = vmatpush1.msra.mxu0 0.0
    %1192 = vmatprep.subr.mxu0 0.0
    %1193 = vmatpush1.msra.mxu0 0.0
    %1194 = vmatprep.subr.mxu0 0.0
    %1195 = vmatpush1.msra.mxu0 0.0
    %1196 = vmatprep.subr.mxu0 0.0
    %1197 = vmatpush1.msra.mxu0 0.0
    %1198 = vmatprep.subr.mxu0 0.0
    %1199 = vmatpush1.msra.mxu0 0.0
    %1200 = vmatprep.subr.mxu0 0.0
    %1201 = vmatpush1.msra.mxu0 0.0
    %1202 = vmatprep.subr.mxu0 0.0
    %1203 = vmatpush1.msra.mxu0 0.0
    %1204 = vmatprep.subr.mxu0 0.0
    %1205 = vmatpush1.msra.mxu0 0.0
    %1206 = vmatprep.subr.mxu0 0.0
    %1207 = vmatpush1.msra.mxu0 0.0
    %1208 = vmatprep.subr.mxu0 0.0
    %1209 = vmatpush1.msra.mxu0 0.0
    %1210 = vmatprep.subr.mxu0 0.0
    %1211 = vmatpush1.msra.mxu0 0.0
    %1212 = vmatprep.subr.mxu0 0.0
    %1213 = vmatpush1.msra.mxu0 0.0
    %1214 = vmatprep.subr.mxu0 0.0
    %1215 = vmatpush1.msra.mxu0 0.0
    %1216 = vmatprep.subr.mxu0 0.0
    %1217 = vmatpush1.msra.mxu0 0.0
    %1218 = vmatprep.subr.mxu0 0.0
    %1219 = vmatpush1.msra.mxu0 0.0
    %1220 = vmatprep.mubr.f32.mxu0 0.0
    %1221 = vmatmul.mubr.f32.gmra.mrb[0].mxu0 %v1154
    %v1222 = vpop.f32.mrb[0].mxu0
    %v1223 = vadd.f32 %v1151, %v1222
    %v1224 = vpop.f32.mrb[0].mxu0
    %1225 = vdwg.mxu0
    %v1226 = vmax.f32 %v1223, 0.0
    %v1227 = vld [vmem:[%s15] sm:$0xff]
    %v1228 = vld [vmem:[%s15 + $0x8] sm:$0xff]
    %v1229 = vld [vmem:[%s15 + $0x10] sm:$0xff]
    %v1230 = vld [vmem:[%s15 + $0x18] sm:$0xff]
    %v1231 = vld [vmem:[%s16] sm:$0x1]
    %v1233 = vlaneseq
    %v1234 = vshrl.u32 %v1233, 7
    %v1235 = vsub.s32 0, %v1234
    %v1236 = vrot.slane %v1231, %v1235
    %v1239 = vsel %vm203, %v1226, 0
    %1241 = vmatprep.subr.mxu0 0.0
    %1242 = vmatpush1.msra.mxu0 %v1227
    %1243 = vmatprep.subr.mxu0 0.0
    %1244 = vmatpush1.msra.mxu0 %v1228
    %1245 = vmatprep.subr.mxu0 0.0
    %1246 = vmatpush1.msra.mxu0 %v1229
    %1247 = vmatprep.subr.mxu0 0.0
    %1248 = vmatpush1.msra.mxu0 %v1230
    %1249 = vmatprep.subr.mxu0 0.0
    %1250 = vmatpush1.msra.mxu0 0.0
    %1251 = vmatprep.subr.mxu0 0.0
    %1252 = vmatpush1.msra.mxu0 0.0
    %1253 = vmatprep.subr.mxu0 0.0
    %1254 = vmatpush1.msra.mxu0 0.0
    %1255 = vmatprep.subr.mxu0 0.0
    %1256 = vmatpush1.msra.mxu0 0.0
    %1257 = vmatprep.subr.mxu0 0.0
    %1258 = vmatpush1.msra.mxu0 0.0
    %1259 = vmatprep.subr.mxu0 0.0
    %1260 = vmatpush1.msra.mxu0 0.0
    %1261 = vmatprep.subr.mxu0 0.0
    %1262 = vmatpush1.msra.mxu0 0.0
    %1263 = vmatprep.subr.mxu0 0.0
    %1264 = vmatpush1.msra.mxu0 0.0
    %1265 = vmatprep.subr.mxu0 0.0
    %1266 = vmatpush1.msra.mxu0 0.0
    %1267 = vmatprep.subr.mxu0 0.0
    %1268 = vmatpush1.msra.mxu0 0.0
    %1269 = vmatprep.subr.mxu0 0.0
    %1270 = vmatpush1.msra.mxu0 0.0
    %1271 = vmatprep.subr.mxu0 0.0
    %1272 = vmatpush1.msra.mxu0 0.0
    %1273 = vmatprep.subr.mxu0 0.0
    %1274 = vmatpush1.msra.mxu0 0.0
    %1275 = vmatprep.subr.mxu0 0.0
    %1276 = vmatpush1.msra.mxu0 0.0
    %1277 = vmatprep.subr.mxu0 0.0
    %1278 = vmatpush1.msra.mxu0 0.0
    %1279 = vmatprep.subr.mxu0 0.0
    %1280 = vmatpush1.msra.mxu0 0.0
    %1281 = vmatprep.subr.mxu0 0.0
    %1282 = vmatpush1.msra.mxu0 0.0
    %1283 = vmatprep.subr.mxu0 0.0
    %1284 = vmatpush1.msra.mxu0 0.0
    %1285 = vmatprep.subr.mxu0 0.0
    %1286 = vmatpush1.msra.mxu0 0.0
    %1287 = vmatprep.subr.mxu0 0.0
    %1288 = vmatpush1.msra.mxu0 0.0
    %1289 = vmatprep.subr.mxu0 0.0
    %1290 = vmatpush1.msra.mxu0 0.0
    %1291 = vmatprep.subr.mxu0 0.0
    %1292 = vmatpush1.msra.mxu0 0.0
    %1293 = vmatprep.subr.mxu0 0.0
    %1294 = vmatpush1.msra.mxu0 0.0
    %1295 = vmatprep.subr.mxu0 0.0
    %1296 = vmatpush1.msra.mxu0 0.0
    %1297 = vmatprep.subr.mxu0 0.0
    %1298 = vmatpush1.msra.mxu0 0.0
    %1299 = vmatprep.subr.mxu0 0.0
    %1300 = vmatpush1.msra.mxu0 0.0
    %1301 = vmatprep.subr.mxu0 0.0
    %1302 = vmatpush1.msra.mxu0 0.0
    %1303 = vmatprep.subr.mxu0 0.0
    %1304 = vmatpush1.msra.mxu0 0.0
    %1305 = vmatprep.mubr.f32.mxu0 0.0
    %1306 = vmatmul.mubr.f32.gmra.mrb[0].mxu0 %v1239
    %v1307 = vpop.f32.mrb[0].mxu0
    %v1308 = vadd.f32 %v1236, %v1307
    %v1309 = vpop.f32.mrb[0].mxu0
    %1310 = vdwg.mxu0
    %v1311 = vcvt.s32.f32 %v280
    %v1312 = vcvt.s32.f32 %v290
    %v1313 = vsel %vm433, %v246, %v1311
    %v1314 = vsel %vm433, %v248, %v1312
    %v1315 = vsel %vm250, %v1313, %v301
    %v1316 = vsel %vm250, %v1314, %v302
    %v1317 = vsel %vm399, %v1315, 0.0
    %v1318 = vsel %vm399, %v1316, 0.0
    %1319 = vst [vmem:[#allocation2] sm:$0xff] %v242
    %1320 = vst [vmem:[#allocation2 + $0x8] sm:$0xff] %v244
    %1321 = vst [vmem:[#allocation2 + $0x10] sm:$0xff] %v1317
    %1322 = vst [vmem:[#allocation2 + $0x18] sm:$0xff] %v1318
    %1324 = vrot.lane.b32.xlu0 %v650, 2
    %v1325 = vpop.permute.xlu0 %1324
    %vm1327 = vcmask 15360
    %v1328 = vsel %vm1327, %v1308, %v1325
    %vm1329 = vcmask 211968
    %v1330 = vsel %vm1329, %v1328, 0.0
    %v1331 = vsel %vm1327, %v1021, 0.0
    %v1332 = vsel %vm1327, %v1026, 0.0
    %1333 = vst.msk [vmem:[#allocation4] sm:$0xff] %vm203, %v1330
    %1334 = vst.msk [vmem:[#allocation4 + $0x8] sm:$0xff] %vm203, %v1331
    %1335 = vst.msk [vmem:[#allocation4 + $0x10] sm:$0xff] %vm203, %v1332
    // Predicated region
    $region70: #{tpu_custom_call.1} parent=1 // pred_check
      _
    $region71: #{tpu_custom_call.1} parent=1 // pred_check_branch
      %1337 = sbr.rel (0) target = $region73
    $region72: #{tpu_custom_call.1} parent=1 // pred_region
      %s1339 = ssub.s32 512, 512
      %1340 = vsyncadd [#allocation3], %s1339
      %s1341 = sshll.u32 [#allocation2], 4
      %s1342 = int_to_ptr.vmem [resolvable:$true] %s1341
      %1347 = dma.vmem_to_hbm [thread:$0]  %s1342, 512, %s17, [#allocation3], 256, 256, 16
    $region73: #{tpu_custom_call.1} parent=1 // pred_fallthru
      _
    // Predicated region
    $region74: #{tpu_custom_call.1} parent=1 // pred_check
      _
    $region75: #{tpu_custom_call.1} parent=1 // pred_check_branch
      %1349 = sbr.rel (0) target = $region77
    $region76: #{tpu_custom_call.1} parent=1 // pred_region
      %s1351 = ssub.s32 384, 384
      %1352 = vsyncadd [#allocation5], %s1351
      %s1353 = sshll.u32 [#allocation4], 4
      %s1354 = int_to_ptr.vmem [resolvable:$true] %s1353
      %1359 = dma.vmem_to_hbm [thread:$0]  %s1354, 384, %s18, [#allocation5], 128, 128, 8
    $region77: #{tpu_custom_call.1} parent=1 // pred_fallthru
      _
    // Predicated region
    $region78: #{tpu_custom_call.1} parent=1 // pred_check
      _
    $region79: #{tpu_custom_call.1} parent=1 // pred_check_branch
      %1361 = sbr.rel (0) target = $region81
    $region80: #{tpu_custom_call.1} parent=1 // pred_region
      %1362 = dma.done [#allocation3], 512
    $region81: #{tpu_custom_call.1} parent=1 // pred_fallthru
      _
    // Predicated region
    $region82: #{tpu_custom_call.1} parent=1 // pred_check
      _
    $region83: #{tpu_custom_call.1} parent=1 // pred_check_branch
      %1364 = sbr.rel (0) target = $region85
    $region84: #{tpu_custom_call.1} parent=1 // pred_region
      %1365 = dma.done [#allocation5], 384
    $region85: #{tpu_custom_call.1} parent=1 // pred_fallthru
      _
    %1366 = vsyncpa [#allocation3], 1
    %1367 = vsyncpa [#allocation5], 1

</llo_original>
